<compile_context>
chip_gen: v7x
topology: tpu7x:2x2x1
jax: 0.10.0
libtpu: 0.0.40
codegen_flags: <defaults>
</compile_context>

<pallas_src>
import functools
import math

import jax
import jax.numpy as jnp
import numpy as np
from jax.experimental import pallas as pl
from jax.experimental.pallas import tpu as pltpu


# ----------------------------- Pallas kernel --------------------------------
def _jump_attn_conv8_kernel(x1_ref, x2_ref, wqkv_ref, tmask1_ref, tmask2_ref,
                            negmask_ref, wc8_ref, bc8_ref, o_ref, *, tb, channels):
    """Channel-major JumpAttention + fused conv8 residual.

    x1_ref / x2_ref / o_ref : (tb, C, N) f32   -- C on sublanes, tokens on lanes
    wqkv_ref                : (3C, C)   bf16   -- fused qkv Linear weight (rows = outputs)
    tmask*/negmask          : (C, C)    f32    -- per-head temperature / block-diag mask
    wc8_ref                 : (C, C)    bf16   -- 1x1x1 conv weight [c_out, c_in]
    bc8_ref                 : (C, 1)    f32
    """
    f32 = jnp.float32
    cdt = wqkv_ref.dtype                       # matmul operand dtype (bf16)
    C = channels

    wqkv = wqkv_ref[...]
    tmask1 = tmask1_ref[...]
    tmask2 = tmask2_ref[...]
    negmask = negmask_ref[...]
    wc8 = wc8_ref[...]
    bc8 = bc8_ref[...]

    def l2norm_rows(t):
        # F.normalize(dim=-1) in (C, N) layout == per-row L2 norm over tokens.
        ss = jnp.maximum(jnp.sum(t * t, axis=-1, keepdims=True), 1e-24)
        return t * jax.lax.rsqrt(ss)

    def blockdiag_softmax(qn, kn, tmask):
        # (C, C) Gram over tokens: contract the lane-dense N axis of both (NT
        # dimension numbers, no materialised transpose).  Kept in f32.
        a = jax.lax.dot_general(qn, kn, (((1,), (1,)), ((), ())),
                                preferred_element_type=f32)
        a = a * tmask + negmask                # per-head temperature + block mask
        a = a - jnp.max(a, axis=-1, keepdims=True)
        p = jnp.exp(a)
        return p * pl.reciprocal(jnp.sum(p, axis=-1, keepdims=True), approx=True)

    def process(b):
        # in-kernel bf16 cast (inputs stay f32 in HBM; cast hides under pipeline)
        x1 = x1_ref[b].astype(cdt)             # (C, N)
        x2 = x2_ref[b].astype(cdt)

        # fused qkv projection: one (3C, C) @ (C, N) matmul per stream
        qkv1 = jnp.dot(wqkv, x1, preferred_element_type=f32)   # (3C, N) f32
        qkv2 = jnp.dot(wqkv, x2, preferred_element_type=f32)
        q1, k1, v1 = qkv1[:C], qkv1[C:2 * C], qkv1[2 * C:]
        q2, k2, v2 = qkv2[:C], qkv2[C:2 * C], qkv2[2 * C:]

        p1 = blockdiag_softmax(l2norm_rows(q1), l2norm_rows(k1), tmask1)
        p2 = blockdiag_softmax(l2norm_rows(q2), l2norm_rows(k2), tmask2)

        # cross-value mixing: x_1 = attn1 @ v2, x_2 = attn2 @ v1  ((C,C)@(C,N))
        x_1 = jnp.dot(p1.astype(cdt), v2.astype(cdt), preferred_element_type=f32)
        x_2 = jnp.dot(p2.astype(cdt), v1.astype(cdt), preferred_element_type=f32)
        attn_out = x_1 + x_2                   # (C, N) f32

        # conv8 (1x1x1 conv == per-token channel mixing) + residual, fused
        y = attn_out + jnp.dot(wc8, attn_out.astype(cdt),
                               preferred_element_type=f32) + bc8
        o_ref[b] = y.astype(o_ref.dtype)

    if tb == 1:
        process(0)
    else:
        def loop_body(b, carry):
            process(b)
            return carry
        jax.lax.fori_loop(0, tb, loop_body, 0, unroll=True)


# ------------------------------ Pallas wrapper -------------------------------
def jump_attention_conv8(x1, x2, wqkv, temp1, temp2, wc8, bc8, *,
                         num_heads, tb=1, compute_dtype=jnp.bfloat16):
    """x1, x2: (B, C, N) channel-major f32 slabs. Returns (B, C, N) f32."""
    B, C, N = x1.shape
    assert C % num_heads == 0 and B % tb == 0
    assert C % 8 == 0 and N % 128 == 0
    hd = C // num_heads

    # block-diagonal temperature / mask helpers (tiny, built once in XLA)
    head_id = jnp.arange(C, dtype=jnp.int32) // hd
    same = (head_id[:, None] == head_id[None, :]).astype(jnp.float32)   # (C, C)
    tmask1 = same * jnp.repeat(temp1.astype(jnp.float32), hd)[:, None]
    tmask2 = same * jnp.repeat(temp2.astype(jnp.float32), hd)[:, None]
    negmask = (1.0 - same) * (-1e30)

    cdt = compute_dtype
    wqkv_c = wqkv.astype(cdt)                  # (3C, C)  nn.Linear weight
    wc8_c = wc8.astype(cdt)                    # (C, C)   Conv3d weight [out, in]
    bc8_c = bc8.reshape(C, 1).astype(jnp.float32)

    isz = int(np.dtype(cdt).itemsize)
    cost = pl.CostEstimate(
        flops=22 * B * N * C * C,
        transcendentals=2 * B * C * C,
        bytes_accessed=(3 * B * C * N * 4 + 4 * C * C * isz + (3 * C * C + C) * 4),
    )

    kernel = functools.partial(_jump_attn_conv8_kernel, tb=tb, channels=C)
    return pl.pallas_call(
        kernel,
        out_shape=jax.ShapeDtypeStruct((B, C, N), jnp.float32),
        grid=(B // tb,),
        in_specs=[
            pl.BlockSpec((tb, C, N), lambda b: (b, 0, 0)),    # x1 (channel-major)
            pl.BlockSpec((tb, C, N), lambda b: (b, 0, 0)),    # x2
            pl.BlockSpec((3 * C, C), lambda b: (0, 0)),       # fused wqkv
            pl.BlockSpec((C, C), lambda b: (0, 0)),           # tmask1
            pl.BlockSpec((C, C), lambda b: (0, 0)),           # tmask2
            pl.BlockSpec((C, C), lambda b: (0, 0)),           # negmask
            pl.BlockSpec((C, C), lambda b: (0, 0)),           # wc8
            pl.BlockSpec((C, 1), lambda b: (0, 0)),           # bc8
        ],
        out_specs=pl.BlockSpec((tb, C, N), lambda b: (b, 0, 0)),
        compiler_params=pltpu.CompilerParams(
            dimension_semantics=("parallel",),
            vmem_limit_bytes=32 * 1024 * 1024),
        cost_estimate=cost,
    )(x1, x2, wqkv_c, tmask1, tmask2, negmask, wc8_c, bc8_c)


# --------------------------- module forward (glue) ---------------------------
def _transp_conv3d(x, w):
    """ConvTranspose3d with kernel == stride == k, padding 0, no bias.
    x: (B, Cin, D, H, W); w: (Cin, Cout, k, k, k) -> (B, Cout, D*k, H*k, W*k).
    Implemented as one matmul over Cin + depth-to-space reshape."""
    B, Cin, D, H, W = x.shape
    Cout, k = w.shape[1], w.shape[2]
    xf = x.reshape(B, Cin, D * H * W)                         # (B, Cin, Nin)
    wf = w.reshape(Cin, Cout * k * k * k)                     # (Cin, Cout*k^3)
    t = jnp.einsum("cp,bcn->bpn", wf, xf)                     # (B, Cout*k^3, Nin)
    t = t.reshape(B, Cout, k, k, k, D, H, W)
    t = jnp.transpose(t, (0, 1, 5, 2, 6, 3, 7, 4))            # (B,Cout,D,kd,H,kh,W,kw)
    return t.reshape(B, Cout, D * k, H * k, W * k)


def unetr_up_block3_forward(inp, skip, params, *, num_heads=4, tb=1,
                            compute_dtype=jnp.bfloat16):
    # TODO(synk): transp_conv runs as plain-JAX matmul + depth-to-space glue.
    up = _transp_conv3d(inp, params["w_up"])                  # (B, C, D, H, W)
    B, C, D, H, W = up.shape
    N = D * H * W
    # channel-major slabs: natural reshape, no (B,C,N)<->(B,N,C) transposes
    x1 = up.reshape(B, C, N)
    x2 = skip.reshape(B, C, N)
    y = jump_attention_conv8(x1, x2, params["wqkv"], params["temp1"],
                             params["temp2"], params["wc8"], params["bc8"],
                             num_heads=num_heads, tb=tb,
                             compute_dtype=compute_dtype)     # (B, C, N)
    out = y.reshape(B, C, D, H, W)
    # TODO(synk): decoder_block (TransformerBlock stack) is not defined in the
    # provided spec; forward returns after the conv8 residual stage.
    # TODO(synk): Dropout / Dropout3d treated as inference no-ops.
    return out


# ------------------------------ pure-JAX reference ---------------------------
def reference_forward(inp, skip, params, *, num_heads=4):
    up = _transp_conv3d(inp, params["w_up"])
    B, C, D, H, W = up.shape
    N = D * H * W
    hd = C // num_heads
    x1 = jnp.transpose(up.reshape(B, C, N), (0, 2, 1))        # (B, N, C) torch layout
    x2 = jnp.transpose(skip.reshape(B, C, N), (0, 2, 1))

    def split_qkv(x):
        qkv = (x @ params["wqkv"].T).reshape(B, N, 3, num_heads, hd)
        qkv = jnp.transpose(qkv, (2, 0, 3, 1, 4))             # (3, B, H, N, hd)
        q, k, v = qkv[0], qkv[1], qkv[2]
        return (jnp.swapaxes(q, -2, -1), jnp.swapaxes(k, -2, -1),
                jnp.swapaxes(v, -2, -1))                       # (B, H, hd, N)

    def l2n(t):
        n = jnp.sqrt(jnp.sum(t * t, axis=-1, keepdims=True))
        return t / jnp.maximum(n, 1e-12)

    q1, k1, v1 = split_qkv(x1)
    q2, k2, v2 = split_qkv(x2)
    q1, k1, q2, k2 = l2n(q1), l2n(k1), l2n(q2), l2n(k2)

    attn1 = jnp.einsum("bhcn,bhdn->bhcd", q1, k1) * params["temp1"][None, :, None, None]
    attn1 = jax.nn.softmax(attn1, axis=-1)
    x_1 = jnp.transpose(jnp.einsum("bhcd,bhdn->bhcn", attn1, v2),
                        (0, 3, 1, 2)).reshape(B, N, C)

    attn2 = jnp.einsum("bhcn,bhdn->bhcd", q2, k2) * params["temp2"][None, :, None, None]
    attn2 = jax.nn.softmax(attn2, axis=-1)
    x_2 = jnp.transpose(jnp.einsum("bhcd,bhdn->bhcn", attn2, v1),
                        (0, 3, 1, 2)).reshape(B, N, C)

    a = x_1 + x_2
    y = a + a @ params["wc8"].T + params["bc8"][None, None, :]
    return jnp.transpose(y, (0, 2, 1)).reshape(B, C, D, H, W)


# ------------------------------ parameter setup -------------------------------
def init_params(key, in_channels, out_channels, num_heads, up_kernel):
    C = out_channels
    ks = jax.random.split(key, 6)
    w_up = (0.1 * jax.random.normal(ks[0], (in_channels, C, up_kernel,
                                            up_kernel, up_kernel))).astype(jnp.float32)
    wqkv = (jax.random.normal(ks[1], (3 * C, C)) *
            (1.0 / math.sqrt(C))).astype(jnp.float32)          # nn.Linear weight (3C, C)
    temp1 = (1.0 + 0.1 * jax.random.normal(ks[2], (num_heads,))).astype(jnp.float32)
    temp2 = (1.0 + 0.1 * jax.random.normal(ks[3], (num_heads,))).astype(jnp.float32)
    wc8 = (0.05 * jax.random.normal(ks[4], (C, C))).astype(jnp.float32)   # Conv3d (out,in)
    bc8 = (0.01 * jax.random.normal(ks[5], (C,))).astype(jnp.float32)
    return dict(w_up=w_up, wqkv=wqkv, temp1=temp1, temp2=temp2, wc8=wc8, bc8=bc8)


# ----------------------------------- main -------------------------------------
if __name__ == "__main__":
    B = 2
    in_channels, out_channels = 64, 32
    num_heads = 4                      # JumpAttention default
    up_kernel = 2
    d1 = h1 = w1 = 4                   # pre-upsample spatial -> 8x8x8, N = 512
    d2, h2, w2 = d1 * up_kernel, h1 * up_kernel, w1 * up_kernel

    key = jax.random.PRNGKey(0)
    kp, ki, ks = jax.random.split(key, 3)
    params = init_params(kp, in_channels, out_channels, num_heads, up_kernel)
    inp = jax.random.normal(ki, (B, in_channels, d1, h1, w1), dtype=jnp.float32)
    skip = jax.random.normal(ks, (B, out_channels, d2, h2, w2), dtype=jnp.float32)

    # tb=1 keeps grid=(2,) so v7x's two TensorCores both get work; on
    # single-TC v5e/v6e, tb=B collapses the grid to one fatter step.
    fwd = jax.jit(lambda a, b, p: unetr_up_block3_forward(
        a, b, p, num_heads=num_heads, tb=1))
    out = jax.block_until_ready(fwd(inp, skip, params))

    ref = reference_forward(inp, skip, params, num_heads=num_heads)
    np_out = np.asarray(out, dtype=np.float32)
    np_ref = np.asarray(ref, dtype=np.float32)

    assert np.all(np.isfinite(np_out))
    # bf16 matmul operands with f32 accumulation -> compare at bf16 tolerance.
    tol = 3e-2 * float(np.max(np.abs(np_ref)))
    assert np.allclose(np_out, np_ref, atol=tol, rtol=3e-2), (
        float(np.max(np.abs(np_out - np_ref))))

    print("KERNEL_OK")
</pallas_src>

<mosaic_0001>
module attributes {stable_mosaic.version = 11 : i64} {
  func.func @_jump_attn_conv8_kernel(%arg0: i32, %arg1: memref<1x32x512xf32, #tpu.memory_space<vmem>>, %arg2: memref<1x32x512xf32, #tpu.memory_space<vmem>>, %arg3: memref<96x32xbf16, #tpu.memory_space<vmem>>, %arg4: memref<32x32xf32, #tpu.memory_space<vmem>>, %arg5: memref<32x32xf32, #tpu.memory_space<vmem>>, %arg6: memref<32x32xf32, #tpu.memory_space<vmem>>, %arg7: memref<32x32xbf16, #tpu.memory_space<vmem>>, %arg8: memref<32x1xf32, #tpu.memory_space<vmem>>, %arg9: memref<1x32x512xf32, #tpu.memory_space<vmem>>) attributes {dimension_semantics = [#tpu.dimension_semantics<parallel>], iteration_bounds = array<i64: 2>, scalar_prefetch = 0 : i64, scratch_operands = 0 : i64, tpu.core_type = #tpu.core_type<tc>, window_params = [{transform_indices = @transform_0, window_bounds = array<i64: 1, 32, 512>}, {transform_indices = @transform_1, window_bounds = array<i64: 1, 32, 512>}, {pipeline_mode = #tpu.pipeline_mode<synchronous>, transform_indices = @transform_2, window_bounds = array<i64: 96, 32>}, {pipeline_mode = #tpu.pipeline_mode<synchronous>, transform_indices = @transform_3, window_bounds = array<i64: 32, 32>}, {pipeline_mode = #tpu.pipeline_mode<synchronous>, transform_indices = @transform_4, window_bounds = array<i64: 32, 32>}, {pipeline_mode = #tpu.pipeline_mode<synchronous>, transform_indices = @transform_5, window_bounds = array<i64: 32, 32>}, {pipeline_mode = #tpu.pipeline_mode<synchronous>, transform_indices = @transform_6, window_bounds = array<i64: 32, 32>}, {pipeline_mode = #tpu.pipeline_mode<synchronous>, transform_indices = @transform_7, window_bounds = array<i64: 32, 1>}, {transform_indices = @transform_8, window_bounds = array<i64: 1, 32, 512>}]} {
    %c0 = arith.constant 0 : index
    %c0_0 = arith.constant 0 : index
    %0 = vector.load %arg3[%c0, %c0_0] : memref<96x32xbf16, #tpu.memory_space<vmem>>, vector<96x32xbf16>
    %c0_1 = arith.constant 0 : index
    %c0_2 = arith.constant 0 : index
    %1 = vector.load %arg4[%c0_1, %c0_2] : memref<32x32xf32, #tpu.memory_space<vmem>>, vector<32x32xf32>
    %c0_3 = arith.constant 0 : index
    %c0_4 = arith.constant 0 : index
    %2 = vector.load %arg5[%c0_3, %c0_4] : memref<32x32xf32, #tpu.memory_space<vmem>>, vector<32x32xf32>
    %c0_5 = arith.constant 0 : index
    %c0_6 = arith.constant 0 : index
    %3 = vector.load %arg6[%c0_5, %c0_6] : memref<32x32xf32, #tpu.memory_space<vmem>>, vector<32x32xf32>
    %c0_7 = arith.constant 0 : index
    %c0_8 = arith.constant 0 : index
    %4 = vector.load %arg7[%c0_7, %c0_8] : memref<32x32xbf16, #tpu.memory_space<vmem>>, vector<32x32xbf16>
    %c0_9 = arith.constant 0 : index
    %c0_10 = arith.constant 0 : index
    %5 = vector.load %arg8[%c0_9, %c0_10] : memref<32x1xf32, #tpu.memory_space<vmem>>, vector<32x1xf32>
    %c0_11 = arith.constant 0 : index
    %c0_12 = arith.constant 0 : index
    %c0_13 = arith.constant 0 : index
    %6 = vector.load %arg1[%c0_11, %c0_12, %c0_13] : memref<1x32x512xf32, #tpu.memory_space<vmem>>, vector<1x32x512xf32>
    %7 = vector.shape_cast %6 : vector<1x32x512xf32> to vector<32x512xf32>
    %8 = arith.truncf %7 : vector<32x512xf32> to vector<32x512xbf16>
    %c0_14 = arith.constant 0 : index
    %c0_15 = arith.constant 0 : index
    %c0_16 = arith.constant 0 : index
    %9 = vector.load %arg2[%c0_14, %c0_15, %c0_16] : memref<1x32x512xf32, #tpu.memory_space<vmem>>, vector<1x32x512xf32>
    %10 = vector.shape_cast %9 : vector<1x32x512xf32> to vector<32x512xf32>
    %11 = arith.truncf %10 : vector<32x512xf32> to vector<32x512xbf16>
    %cst = arith.constant dense<0.000000e+00> : vector<96x512xf32>
    %12 = tpu.matmul %0, %8, %cst {dimension_numbers = #tpu.dot_dimension_numbers<[1], [0], [0], [1], [0, 0, 1, 1], [], []>} : vector<96x32xbf16>, vector<32x512xbf16>, vector<96x512xf32> -> vector<96x512xf32>
    %cst_17 = arith.constant dense<0.000000e+00> : vector<96x512xf32>
    %13 = tpu.matmul %0, %11, %cst_17 {dimension_numbers = #tpu.dot_dimension_numbers<[1], [0], [0], [1], [0, 0, 1, 1], [], []>} : vector<96x32xbf16>, vector<32x512xbf16>, vector<96x512xf32> -> vector<96x512xf32>
    %14 = vector.extract_strided_slice %12 {offsets = [0, 0], sizes = [32, 512], strides = [1, 1]} : vector<96x512xf32> to vector<32x512xf32>
    %15 = vector.extract_strided_slice %12 {offsets = [32, 0], sizes = [32, 512], strides = [1, 1]} : vector<96x512xf32> to vector<32x512xf32>
    %16 = vector.extract_strided_slice %12 {offsets = [64, 0], sizes = [32, 512], strides = [1, 1]} : vector<96x512xf32> to vector<32x512xf32>
    %17 = vector.extract_strided_slice %13 {offsets = [0, 0], sizes = [32, 512], strides = [1, 1]} : vector<96x512xf32> to vector<32x512xf32>
    %18 = vector.extract_strided_slice %13 {offsets = [32, 0], sizes = [32, 512], strides = [1, 1]} : vector<96x512xf32> to vector<32x512xf32>
    %19 = vector.extract_strided_slice %13 {offsets = [64, 0], sizes = [32, 512], strides = [1, 1]} : vector<96x512xf32> to vector<32x512xf32>
    %20 = arith.mulf %14, %14 : vector<32x512xf32>
    %cst_18 = arith.constant dense<0.000000e+00> : vector<32xf32>
    %21 = vector.multi_reduction <add>, %20, %cst_18 [1] : vector<32x512xf32> to vector<32xf32>
    %22 = vector.shape_cast %21 : vector<32xf32> to vector<32x1xf32>
    %cst_19 = arith.constant 1.000000e-24 : f32
    %23 = vector.broadcast %cst_19 : f32 to vector<32x1xf32>
    %24 = arith.maximumf %22, %23 : vector<32x1xf32>
    %25 = math.rsqrt %24 : vector<32x1xf32>
    %26 = vector.broadcast %25 : vector<32x1xf32> to vector<32x512xf32>
    %27 = arith.mulf %14, %26 : vector<32x512xf32>
    %28 = arith.mulf %15, %15 : vector<32x512xf32>
    %cst_20 = arith.constant dense<0.000000e+00> : vector<32xf32>
    %29 = vector.multi_reduction <add>, %28, %cst_20 [1] : vector<32x512xf32> to vector<32xf32>
    %30 = vector.shape_cast %29 : vector<32xf32> to vector<32x1xf32>
    %cst_21 = arith.constant 1.000000e-24 : f32
    %31 = vector.broadcast %cst_21 : f32 to vector<32x1xf32>
    %32 = arith.maximumf %30, %31 : vector<32x1xf32>
    %33 = math.rsqrt %32 : vector<32x1xf32>
    %34 = vector.broadcast %33 : vector<32x1xf32> to vector<32x512xf32>
    %35 = arith.mulf %15, %34 : vector<32x512xf32>
    %cst_22 = arith.constant dense<0.000000e+00> : vector<32x32xf32>
    %36 = tpu.matmul %27, %35, %cst_22 {dimension_numbers = #tpu.dot_dimension_numbers<[1], [1], [0], [0], [0, 0, 1, 0], [], []>} : vector<32x512xf32>, vector<32x512xf32>, vector<32x32xf32> -> vector<32x32xf32>
    %37 = arith.mulf %36, %1 : vector<32x32xf32>
    %38 = arith.addf %37, %3 : vector<32x32xf32>
    %cst_23 = arith.constant dense<0xFF800000> : vector<32xf32>
    %39 = vector.multi_reduction <maximumf>, %38, %cst_23 [1] : vector<32x32xf32> to vector<32xf32>
    %40 = vector.shape_cast %39 : vector<32xf32> to vector<32x1xf32>
    %41 = vector.broadcast %40 : vector<32x1xf32> to vector<32x32xf32>
    %42 = arith.subf %38, %41 : vector<32x32xf32>
    %43 = math.exp %42 : vector<32x32xf32>
    %cst_24 = arith.constant dense<0.000000e+00> : vector<32xf32>
    %44 = vector.multi_reduction <add>, %43, %cst_24 [1] : vector<32x32xf32> to vector<32xf32>
    %45 = vector.shape_cast %44 : vector<32xf32> to vector<32x1xf32>
    %46 = tpu.reciprocal %45 {approx = true} : vector<32x1xf32> -> vector<32x1xf32>
    %47 = vector.broadcast %46 : vector<32x1xf32> to vector<32x32xf32>
    %48 = arith.mulf %43, %47 : vector<32x32xf32>
    %49 = arith.mulf %17, %17 : vector<32x512xf32>
    %cst_25 = arith.constant dense<0.000000e+00> : vector<32xf32>
    %50 = vector.multi_reduction <add>, %49, %cst_25 [1] : vector<32x512xf32> to vector<32xf32>
    %51 = vector.shape_cast %50 : vector<32xf32> to vector<32x1xf32>
    %cst_26 = arith.constant 1.000000e-24 : f32
    %52 = vector.broadcast %cst_26 : f32 to vector<32x1xf32>
    %53 = arith.maximumf %51, %52 : vector<32x1xf32>
    %54 = math.rsqrt %53 : vector<32x1xf32>
    %55 = vector.broadcast %54 : vector<32x1xf32> to vector<32x512xf32>
    %56 = arith.mulf %17, %55 : vector<32x512xf32>
    %57 = arith.mulf %18, %18 : vector<32x512xf32>
    %cst_27 = arith.constant dense<0.000000e+00> : vector<32xf32>
    %58 = vector.multi_reduction <add>, %57, %cst_27 [1] : vector<32x512xf32> to vector<32xf32>
    %59 = vector.shape_cast %58 : vector<32xf32> to vector<32x1xf32>
    %cst_28 = arith.constant 1.000000e-24 : f32
    %60 = vector.broadcast %cst_28 : f32 to vector<32x1xf32>
    %61 = arith.maximumf %59, %60 : vector<32x1xf32>
    %62 = math.rsqrt %61 : vector<32x1xf32>
    %63 = vector.broadcast %62 : vector<32x1xf32> to vector<32x512xf32>
    %64 = arith.mulf %18, %63 : vector<32x512xf32>
    %cst_29 = arith.constant dense<0.000000e+00> : vector<32x32xf32>
    %65 = tpu.matmul %56, %64, %cst_29 {dimension_numbers = #tpu.dot_dimension_numbers<[1], [1], [0], [0], [0, 0, 1, 0], [], []>} : vector<32x512xf32>, vector<32x512xf32>, vector<32x32xf32> -> vector<32x32xf32>
    %66 = arith.mulf %65, %2 : vector<32x32xf32>
    %67 = arith.addf %66, %3 : vector<32x32xf32>
    %cst_30 = arith.constant dense<0xFF800000> : vector<32xf32>
    %68 = vector.multi_reduction <maximumf>, %67, %cst_30 [1] : vector<32x32xf32> to vector<32xf32>
    %69 = vector.shape_cast %68 : vector<32xf32> to vector<32x1xf32>
    %70 = vector.broadcast %69 : vector<32x1xf32> to vector<32x32xf32>
    %71 = arith.subf %67, %70 : vector<32x32xf32>
    %72 = math.exp %71 : vector<32x32xf32>
    %cst_31 = arith.constant dense<0.000000e+00> : vector<32xf32>
    %73 = vector.multi_reduction <add>, %72, %cst_31 [1] : vector<32x32xf32> to vector<32xf32>
    %74 = vector.shape_cast %73 : vector<32xf32> to vector<32x1xf32>
    %75 = tpu.reciprocal %74 {approx = true} : vector<32x1xf32> -> vector<32x1xf32>
    %76 = vector.broadcast %75 : vector<32x1xf32> to vector<32x32xf32>
    %77 = arith.mulf %72, %76 : vector<32x32xf32>
    %78 = arith.truncf %48 : vector<32x32xf32> to vector<32x32xbf16>
    %79 = arith.truncf %19 : vector<32x512xf32> to vector<32x512xbf16>
    %cst_32 = arith.constant dense<0.000000e+00> : vector<32x512xf32>
    %80 = tpu.matmul %78, %79, %cst_32 {dimension_numbers = #tpu.dot_dimension_numbers<[1], [0], [0], [1], [0, 0, 1, 1], [], []>} : vector<32x32xbf16>, vector<32x512xbf16>, vector<32x512xf32> -> vector<32x512xf32>
    %81 = arith.truncf %77 : vector<32x32xf32> to vector<32x32xbf16>
    %82 = arith.truncf %16 : vector<32x512xf32> to vector<32x512xbf16>
    %cst_33 = arith.constant dense<0.000000e+00> : vector<32x512xf32>
    %83 = tpu.matmul %81, %82, %cst_33 {dimension_numbers = #tpu.dot_dimension_numbers<[1], [0], [0], [1], [0, 0, 1, 1], [], []>} : vector<32x32xbf16>, vector<32x512xbf16>, vector<32x512xf32> -> vector<32x512xf32>
    %84 = arith.addf %80, %83 : vector<32x512xf32>
    %85 = arith.truncf %84 : vector<32x512xf32> to vector<32x512xbf16>
    %cst_34 = arith.constant dense<0.000000e+00> : vector<32x512xf32>
    %86 = tpu.matmul %4, %85, %cst_34 {dimension_numbers = #tpu.dot_dimension_numbers<[1], [0], [0], [1], [0, 0, 1, 1], [], []>} : vector<32x32xbf16>, vector<32x512xbf16>, vector<32x512xf32> -> vector<32x512xf32>
    %87 = arith.addf %84, %86 : vector<32x512xf32>
    %88 = vector.broadcast %5 : vector<32x1xf32> to vector<32x512xf32>
    %89 = arith.addf %87, %88 : vector<32x512xf32>
    %c0_35 = arith.constant 0 : index
    %c0_36 = arith.constant 0 : index
    %c0_37 = arith.constant 0 : index
    %90 = vector.load %arg9[%c0_35, %c0_36, %c0_37] : memref<1x32x512xf32, #tpu.memory_space<vmem>>, vector<1x32x512xf32>
    %91 = vector.shape_cast %90 : vector<1x32x512xf32> to vector<32x512xf32>
    %92 = vector.shape_cast %89 : vector<32x512xf32> to vector<1x32x512xf32>
    tpu.vector_store %arg9[%c0_35, %c0_36, %c0_37], %92 {strides = array<i32>} : memref<1x32x512xf32, #tpu.memory_space<vmem>>, vector<1x32x512xf32>,
    return
  }
  func.func @transform_0(%arg0: i32) -> (i32, i32, i32) {
    %c0_i32 = arith.constant 0 : i32
    %c0_i32_0 = arith.constant 0 : i32
    %c0_i32_1 = arith.constant 0 : i32
    return %arg0, %c0_i32, %c0_i32_0 : i32, i32, i32
  }
  func.func @transform_1(%arg0: i32) -> (i32, i32, i32) {
    %c0_i32 = arith.constant 0 : i32
    %c0_i32_0 = arith.constant 0 : i32
    %c0_i32_1 = arith.constant 0 : i32
    return %arg0, %c0_i32, %c0_i32_0 : i32, i32, i32
  }
  func.func @transform_2(%arg0: i32) -> (i32, i32) {
    %c0_i32 = arith.constant 0 : i32
    %c0_i32_0 = arith.constant 0 : i32
    %c0_i32_1 = arith.constant 0 : i32
    return %c0_i32, %c0_i32_0 : i32, i32
  }
  func.func @transform_3(%arg0: i32) -> (i32, i32) {
    %c0_i32 = arith.constant 0 : i32
    %c0_i32_0 = arith.constant 0 : i32
    %c0_i32_1 = arith.constant 0 : i32
    return %c0_i32, %c0_i32_0 : i32, i32
  }
  func.func @transform_4(%arg0: i32) -> (i32, i32) {
    %c0_i32 = arith.constant 0 : i32
    %c0_i32_0 = arith.constant 0 : i32
    %c0_i32_1 = arith.constant 0 : i32
    return %c0_i32, %c0_i32_0 : i32, i32
  }
  func.func @transform_5(%arg0: i32) -> (i32, i32) {
    %c0_i32 = arith.constant 0 : i32
    %c0_i32_0 = arith.constant 0 : i32
    %c0_i32_1 = arith.constant 0 : i32
    return %c0_i32, %c0_i32_0 : i32, i32
  }
  func.func @transform_6(%arg0: i32) -> (i32, i32) {
    %c0_i32 = arith.constant 0 : i32
    %c0_i32_0 = arith.constant 0 : i32
    %c0_i32_1 = arith.constant 0 : i32
    return %c0_i32, %c0_i32_0 : i32, i32
  }
  func.func @transform_7(%arg0: i32) -> (i32, i32) {
    %c0_i32 = arith.constant 0 : i32
    %c0_i32_0 = arith.constant 0 : i32
    %c0_i32_1 = arith.constant 0 : i32
    return %c0_i32, %c0_i32_0 : i32, i32
  }
  func.func @transform_8(%arg0: i32) -> (i32, i32, i32) {
    %c0_i32 = arith.constant 0 : i32
    %c0_i32_0 = arith.constant 0 : i32
    %c0_i32_1 = arith.constant 0 : i32
    return %arg0, %c0_i32, %c0_i32_0 : i32, i32, i32
  }
}

</mosaic_0001>

<llo_original>
// kernel: mul.12
$region0: #{mul.12}
  %s0 = inlined_call_operand.vmem [shape: f32[4,8], index: 0, kind: input, shape index: {}]
  %s1 = inlined_call_operand.vmem [shape: f32[32], index: 1, kind: output, shape index: {}]
  $region1: #{mul.12} parent=0
    #allocation0 [shape = 'u8[4096]{0}', space=vmem, size = 0x1000, scoped, tag = 'scoped mem for output reshape']
    #allocation1 [shape = 'u8[4096]{0}', space=vmem, size = 0x1000, scoped, tag = 'scoped mem for input reshape']
    %s3 = sshllo.u32 0, 4
    %v4 = vld [vmem:[%s0] sm:%s3]
    %5 = vst [vmem:[#allocation1] sm:%s3] %v4
    %v6 = vld [vmem:[#allocation1] sm:$0x1]
    %vm7 = vcmask 64512
    %8 = vst.msk [vmem:[#allocation0] sm:$0x1] %vm7, %v6
    %s9 = scalar_lea.vmem [#allocation1], 3
    %v10 = vld [vmem:[%s9] sm:$0x1]
    %11 = vrot.lane.b32.xlu0 %v10, 24
    %v12 = vpop.permute.xlu0 %11
    %vm13 = vcmask 261312
    %14 = vst.msk [vmem:[#allocation0] sm:$0x1] %vm13, %v12
    %s15 = scalar_lea.vmem [#allocation1], 2
    %v16 = vld [vmem:[%s15] sm:$0x1]
    %17 = vrot.lane.b32.xlu0 %v16, 16
    %v18 = vpop.permute.xlu0 %17
    %vm19 = vcmask 195712
    %20 = vst.msk [vmem:[#allocation0] sm:$0x1] %vm19, %v18
    %s21 = scalar_lea.vmem [#allocation1], 1
    %v22 = vld [vmem:[%s21] sm:$0x1]
    %23 = vrot.lane.b32.xlu0 %v22, 8
    %v24 = vpop.permute.xlu0 %23
    %vm25 = vcmask 130112
    %26 = vst.msk [vmem:[#allocation0] sm:$0x1] %vm25, %v24
    %s28 = sshllo.u32 0, 1
    %v30 = vld [vmem:[#allocation0] sm:%s28]
    %s31 = sshllo.u32 0, 1
    %32 = vst [vmem:[%s1] sm:%s31] %v30

// kernel: _lambda_.1
$region0: #{_lambda_.1}
  #allocation0 [shape = 'u32[]', space=smem, size = 0x4, offset = 0x4, fixed_abs, tag = 'smem constant byte address 0x4 - core index']
  #allocation1 [shape = 'u32[144,128]{1,0:T(1,128)}', space=vmem, size = 0x12000, scoped, tag = 'internal scratch']
  %s0 = inlined_call_operand.vmem [shape: f32[2,32,512], index: 0, kind: input, shape index: {}]
  %s1 = inlined_call_operand.vmem [shape: f32[2,32,512], index: 1, kind: input, shape index: {}]
  %s2 = inlined_call_operand.vmem [shape: bf16[96,32], index: 2, kind: input, shape index: {}]
  %s3 = inlined_call_operand.vmem [shape: f32[32,32], index: 3, kind: input, shape index: {}]
  %s4 = inlined_call_operand.vmem [shape: f32[32,32], index: 4, kind: input, shape index: {}]
  %s5 = inlined_call_operand.vmem [shape: f32[32,32], index: 5, kind: input, shape index: {}]
  %s6 = inlined_call_operand.vmem [shape: bf16[32,32], index: 6, kind: input, shape index: {}]
  %s7 = inlined_call_operand.vmem [shape: f32[32,1], index: 7, kind: input, shape index: {}]
  %s8 = inlined_call_operand.vmem [shape: f32[2,32,512], index: 8, kind: output, shape index: {}]
  %s9 = sld [smem:[#allocation0]]
  $region65: #{_lambda_.1} parent=0
    _
  %s11 = ssub.s32 1, %s9
  %s12 = scalar_select 0, %s11, %s9
  loop: start=0, step=1, limit=4
  $region2: #{_lambda_.1} parent=0 // loop_pre_header
    _
  $region3: #{_lambda_.1} parent=0 // loop_header
    %s14 = sphi 0, %s18
    %p15 = scmp.ge.s32.totalorder %s14, 4
    %s24 = sphi 0, %s26
    %s27 = sphi 0, %s24
    %s28 = sphi 0, %s27
    %s44 = sphi 0, %s28
    %s50 = sphi 0, %s52
    %s53 = sphi 0, %s50
    %s54 = sphi 0, %s53
    %s70 = sphi 0, %s54
    %s74 = sphi 0, %s74
    %s76 = sphi 0, %s74
    %s77 = sphi 0, %s76
    %s91 = sphi 0, %s77
    %s95 = sphi 0, %s95
    %s97 = sphi 0, %s95
    %s98 = sphi 0, %s97
    %s112 = sphi 0, %s98
    %s116 = sphi 0, %s116
    %s118 = sphi 0, %s116
    %s119 = sphi 0, %s118
    %s133 = sphi 0, %s119
    %s137 = sphi 0, %s137
    %s139 = sphi 0, %s137
    %s140 = sphi 0, %s139
    %s154 = sphi 0, %s140
    %s158 = sphi 0, %s158
    %s160 = sphi 0, %s158
    %s161 = sphi 0, %s160
    %s175 = sphi 0, %s161
    %s179 = sphi 0, %s179
    %s181 = sphi 0, %s179
    %s182 = sphi 0, %s181
    %s196 = sphi 0, %s182
    %s202 = sphi 0, %s204
    %s205 = sphi 0, %s202
    %s206 = sphi 0, %s205
    %s222 = sphi 0, %s206
  $region4: #{_lambda_.1} parent=0 // loop_header_branch
    %17 = sbr.rel (%p15) target = $region8
  $region5: #{_lambda_.1} parent=0 // loop_body
    %s19 = ssub.s32 %s14, 1
    %s20 = ssub.s32 %s14, 2
    %s21 = sadd.s32 %s14, 1
    %s22 = ssub.s32 %s14, %s21
    %p23 = scmp.eq.s32.totalorder %s22, 0
    %s25 = sadd.s32 %s24, 1
    %s26 = scalar_select %p23, %s24, %s25
    %p29 = pneg %p23
    %p30 = scmp.eq.s32.totalorder %s14, 1
    %p31 = por %p29, %p30
    %p32 = scmp.ne.s32.totalorder %s24, %s27
    %p33 = scmp.eq.s32.totalorder %s14, 0
    %p34 = por %p32, %p33
    %p35 = scmp.ne.s32.totalorder %s24, %s27
    %p36 = scmp.eq.s32.totalorder %s19, 1
    %p37 = por %p35, %p36
    %p38 = scmp.ne.s32.totalorder %s27, %s28
    %p39 = scmp.eq.s32.totalorder %s19, 0
    %p40 = por %p38, %p39
    %p41 = scmp.ne.s32.totalorder %s27, %s28
    %p42 = scmp.eq.s32.totalorder %s20, 1
    %p43 = por %p41, %p42
    %p45 = scmp.ne.s32.totalorder %s28, %s44
    %p46 = scmp.eq.s32.totalorder %s20, 0
    %p47 = por %p45, %p46
    %s48 = ssub.s32 %s14, %s21
    %p49 = scmp.eq.s32.totalorder %s48, 0
    %s51 = sadd.s32 %s50, 1
    %s52 = scalar_select %p49, %s50, %s51
    %p55 = pneg %p49
    %p56 = scmp.eq.s32.totalorder %s14, 1
    %p57 = por %p55, %p56
    %p58 = scmp.ne.s32.totalorder %s50, %s53
    %p59 = scmp.eq.s32.totalorder %s14, 0
    %p60 = por %p58, %p59
    %p61 = scmp.ne.s32.totalorder %s50, %s53
    %p62 = scmp.eq.s32.totalorder %s19, 1
    %p63 = por %p61, %p62
    %p64 = scmp.ne.s32.totalorder %s53, %s54
    %p65 = scmp.eq.s32.totalorder %s19, 0
    %p66 = por %p64, %p65
    %p67 = scmp.ne.s32.totalorder %s53, %s54
    %p68 = scmp.eq.s32.totalorder %s20, 1
    %p69 = por %p67, %p68
    %p71 = scmp.ne.s32.totalorder %s54, %s70
    %p72 = scmp.eq.s32.totalorder %s20, 0
    %p73 = por %p71, %p72
    %s75 = sadd.s32 %s74, 1
    %p78 = scmp.eq.s32.totalorder %s14, 1
    %p79 = scmp.ne.s32.totalorder %s74, %s76
    %p80 = scmp.eq.s32.totalorder %s14, 0
    %p81 = por %p79, %p80
    %p82 = scmp.ne.s32.totalorder %s74, %s76
    %p83 = scmp.eq.s32.totalorder %s19, 1
    %p84 = por %p82, %p83
    %p85 = scmp.ne.s32.totalorder %s76, %s77
    %p86 = scmp.eq.s32.totalorder %s19, 0
    %p87 = por %p85, %p86
    %p88 = scmp.ne.s32.totalorder %s76, %s77
    %p89 = scmp.eq.s32.totalorder %s20, 1
    %p90 = por %p88, %p89
    %p92 = scmp.ne.s32.totalorder %s77, %s91
    %p93 = scmp.eq.s32.totalorder %s20, 0
    %p94 = por %p92, %p93
    %s96 = sadd.s32 %s95, 1
    %p99 = scmp.eq.s32.totalorder %s14, 1
    %p100 = scmp.ne.s32.totalorder %s95, %s97
    %p101 = scmp.eq.s32.totalorder %s14, 0
    %p102 = por %p100, %p101
    %p103 = scmp.ne.s32.totalorder %s95, %s97
    %p104 = scmp.eq.s32.totalorder %s19, 1
    %p105 = por %p103, %p104
    %p106 = scmp.ne.s32.totalorder %s97, %s98
    %p107 = scmp.eq.s32.totalorder %s19, 0
    %p108 = por %p106, %p107
    %p109 = scmp.ne.s32.totalorder %s97, %s98
    %p110 = scmp.eq.s32.totalorder %s20, 1
    %p111 = por %p109, %p110
    %p113 = scmp.ne.s32.totalorder %s98, %s112
    %p114 = scmp.eq.s32.totalorder %s20, 0
    %p115 = por %p113, %p114
    %s117 = sadd.s32 %s116, 1
    %p120 = scmp.eq.s32.totalorder %s14, 1
    %p121 = scmp.ne.s32.totalorder %s116, %s118
    %p122 = scmp.eq.s32.totalorder %s14, 0
    %p123 = por %p121, %p122
    %p124 = scmp.ne.s32.totalorder %s116, %s118
    %p125 = scmp.eq.s32.totalorder %s19, 1
    %p126 = por %p124, %p125
    %p127 = scmp.ne.s32.totalorder %s118, %s119
    %p128 = scmp.eq.s32.totalorder %s19, 0
    %p129 = por %p127, %p128
    %p130 = scmp.ne.s32.totalorder %s118, %s119
    %p131 = scmp.eq.s32.totalorder %s20, 1
    %p132 = por %p130, %p131
    %p134 = scmp.ne.s32.totalorder %s119, %s133
    %p135 = scmp.eq.s32.totalorder %s20, 0
    %p136 = por %p134, %p135
    %s138 = sadd.s32 %s137, 1
    %p141 = scmp.eq.s32.totalorder %s14, 1
    %p142 = scmp.ne.s32.totalorder %s137, %s139
    %p143 = scmp.eq.s32.totalorder %s14, 0
    %p144 = por %p142, %p143
    %p145 = scmp.ne.s32.totalorder %s137, %s139
    %p146 = scmp.eq.s32.totalorder %s19, 1
    %p147 = por %p145, %p146
    %p148 = scmp.ne.s32.totalorder %s139, %s140
    %p149 = scmp.eq.s32.totalorder %s19, 0
    %p150 = por %p148, %p149
    %p151 = scmp.ne.s32.totalorder %s139, %s140
    %p152 = scmp.eq.s32.totalorder %s20, 1
    %p153 = por %p151, %p152
    %p155 = scmp.ne.s32.totalorder %s140, %s154
    %p156 = scmp.eq.s32.totalorder %s20, 0
    %p157 = por %p155, %p156
    %s159 = sadd.s32 %s158, 1
    %p162 = scmp.eq.s32.totalorder %s14, 1
    %p163 = scmp.ne.s32.totalorder %s158, %s160
    %p164 = scmp.eq.s32.totalorder %s14, 0
    %p165 = por %p163, %p164
    %p166 = scmp.ne.s32.totalorder %s158, %s160
    %p167 = scmp.eq.s32.totalorder %s19, 1
    %p168 = por %p166, %p167
    %p169 = scmp.ne.s32.totalorder %s160, %s161
    %p170 = scmp.eq.s32.totalorder %s19, 0
    %p171 = por %p169, %p170
    %p172 = scmp.ne.s32.totalorder %s160, %s161
    %p173 = scmp.eq.s32.totalorder %s20, 1
    %p174 = por %p172, %p173
    %p176 = scmp.ne.s32.totalorder %s161, %s175
    %p177 = scmp.eq.s32.totalorder %s20, 0
    %p178 = por %p176, %p177
    %s180 = sadd.s32 %s179, 1
    %p183 = scmp.eq.s32.totalorder %s14, 1
    %p184 = scmp.ne.s32.totalorder %s179, %s181
    %p185 = scmp.eq.s32.totalorder %s14, 0
    %p186 = por %p184, %p185
    %p187 = scmp.ne.s32.totalorder %s179, %s181
    %p188 = scmp.eq.s32.totalorder %s19, 1
    %p189 = por %p187, %p188
    %p190 = scmp.ne.s32.totalorder %s181, %s182
    %p191 = scmp.eq.s32.totalorder %s19, 0
    %p192 = por %p190, %p191
    %p193 = scmp.ne.s32.totalorder %s181, %s182
    %p194 = scmp.eq.s32.totalorder %s20, 1
    %p195 = por %p193, %p194
    %p197 = scmp.ne.s32.totalorder %s182, %s196
    %p198 = scmp.eq.s32.totalorder %s20, 0
    %p199 = por %p197, %p198
    %s200 = ssub.s32 %s14, %s21
    %p201 = scmp.eq.s32.totalorder %s200, 0
    %s203 = sadd.s32 %s202, 1
    %s204 = scalar_select %p201, %s202, %s203
    %p207 = pneg %p201
    %p208 = scmp.eq.s32.totalorder %s14, 1
    %p209 = por %p207, %p208
    %p210 = scmp.ne.s32.totalorder %s202, %s205
    %p211 = scmp.eq.s32.totalorder %s14, 0
    %p212 = por %p210, %p211
    %p213 = scmp.ne.s32.totalorder %s202, %s205
    %p214 = scmp.eq.s32.totalorder %s19, 1
    %p215 = por %p213, %p214
    %p216 = scmp.ne.s32.totalorder %s205, %s206
    %p217 = scmp.eq.s32.totalorder %s19, 0
    %p218 = por %p216, %p217
    %p219 = scmp.ne.s32.totalorder %s205, %s206
    %p220 = scmp.eq.s32.totalorder %s20, 1
    %p221 = por %p219, %p220
    %p223 = scmp.ne.s32.totalorder %s206, %s222
    %p224 = scmp.eq.s32.totalorder %s20, 0
    %p225 = por %p223, %p224
    %p226 = scmp.le.s32.totalorder 1, %s14
    %p227 = scmp.lt.s32.totalorder %s14, 3
    %p228 = pnand %p226, %p227
    %p229 = pneg %p228
    // Predicated region
    $region9: #{_lambda_.1} parent=5 // pred_check
      _
    $region10: #{_lambda_.1} parent=5 // pred_check_branch
      %231 = sbr.rel (%p228) target = $region12
    $region11: #{_lambda_.1} parent=5 // pred_region
      %s232 = ssub.s32 %s14, 1
      // Predicated region
      $region13: #{_lambda_.1} parent=11 // pred_check
        %p233 = pneg %p87
      $region14: #{_lambda_.1} parent=11 // pred_check_branch
        %235 = sbr.rel (%p233) target = $region16
      $region15: #{_lambda_.1} parent=11 // pred_region
        _
      $region16: #{_lambda_.1} parent=11 // pred_fallthru
        _
      // Predicated region
      $region17: #{_lambda_.1} parent=11 // pred_check
        %p236 = pneg %p108
      $region18: #{_lambda_.1} parent=11 // pred_check_branch
        %238 = sbr.rel (%p236) target = $region20
      $region19: #{_lambda_.1} parent=11 // pred_region
        _
      $region20: #{_lambda_.1} parent=11 // pred_fallthru
        _
      // Predicated region
      $region21: #{_lambda_.1} parent=11 // pred_check
        %p239 = pneg %p129
      $region22: #{_lambda_.1} parent=11 // pred_check_branch
        %241 = sbr.rel (%p239) target = $region24
      $region23: #{_lambda_.1} parent=11 // pred_region
        _
      $region24: #{_lambda_.1} parent=11 // pred_fallthru
        _
      // Predicated region
      $region25: #{_lambda_.1} parent=11 // pred_check
        %p242 = pneg %p150
      $region26: #{_lambda_.1} parent=11 // pred_check_branch
        %244 = sbr.rel (%p242) target = $region28
      $region27: #{_lambda_.1} parent=11 // pred_region
        _
      $region28: #{_lambda_.1} parent=11 // pred_fallthru
        _
      // Predicated region
      $region29: #{_lambda_.1} parent=11 // pred_check
        %p245 = pneg %p171
      $region30: #{_lambda_.1} parent=11 // pred_check_branch
        %247 = sbr.rel (%p245) target = $region32
      $region31: #{_lambda_.1} parent=11 // pred_region
        _
      $region32: #{_lambda_.1} parent=11 // pred_fallthru
        _
      // Predicated region
      $region33: #{_lambda_.1} parent=11 // pred_check
        %p248 = pneg %p192
      $region34: #{_lambda_.1} parent=11 // pred_check_branch
        %250 = sbr.rel (%p248) target = $region36
      $region35: #{_lambda_.1} parent=11 // pred_region
        _
      $region36: #{_lambda_.1} parent=11 // pred_fallthru
        _
    $region12: #{_lambda_.1} parent=5 // pred_fallthru
      _
    %p251 = scmp.lt.s32.totalorder %s14, 2
    // Predicated region
    $region37: #{_lambda_.1} parent=5 // pred_check
      %p252 = pneg %p251
    $region38: #{_lambda_.1} parent=5 // pred_check_branch
      %254 = sbr.rel (%p252) target = $region40
    $region39: #{_lambda_.1} parent=5 // pred_region
      // Predicated region
      $region41: #{_lambda_.1} parent=39 // pred_check
        %p255 = pneg %p34
      $region42: #{_lambda_.1} parent=39 // pred_check_branch
        %257 = sbr.rel (%p255) target = $region44
      $region43: #{_lambda_.1} parent=39 // pred_region
        %p258 = scmp.lt.s32.totalorder %s14, 1
        %s259 = scalar_select %p258, %s14, 1
        %s260 = smul.addr %s259, 16
        %s261 = smul.addr %s260, 8
        %s262 = scalar_lea.vmem %s0, %s261
      $region44: #{_lambda_.1} parent=39 // pred_fallthru
        _
      // Predicated region
      $region45: #{_lambda_.1} parent=39 // pred_check
        %p263 = pneg %p60
      $region46: #{_lambda_.1} parent=39 // pred_check_branch
        %265 = sbr.rel (%p263) target = $region48
      $region47: #{_lambda_.1} parent=39 // pred_region
        %p266 = scmp.lt.s32.totalorder %s14, 1
        %s267 = scalar_select %p266, %s14, 1
        %s268 = smul.addr %s267, 16
        %s269 = smul.addr %s268, 8
        %s270 = scalar_lea.vmem %s1, %s269
      $region48: #{_lambda_.1} parent=39 // pred_fallthru
        _
    $region40: #{_lambda_.1} parent=5 // pred_fallthru
      _
    %p271 = scmp.le.s32.totalorder 1, %s14
    %p272 = scmp.lt.s32.totalorder %s14, 3
    %p273 = pnand %p271, %p272
    %p274 = pneg %p273
    // Predicated region
    $region49: #{_lambda_.1} parent=5 // pred_check
      _
    $region50: #{_lambda_.1} parent=5 // pred_check_branch
      %276 = sbr.rel (%p273) target = $region52
    $region51: #{_lambda_.1} parent=5 // pred_region
      %s277 = ssub.s32 %s14, 1
      %p278 = scmp.lt.s32.totalorder %s19, 1
      %s279 = scalar_select %p278, %s19, 1
      %s280 = smul.addr %s279, 16
      %s281 = smul.addr %s280, 8
      %s282 = scalar_lea.vmem %s0, %s281
      %p283 = pneg %p40
      %p284 = pneg %p37
      %p285 = scmp.lt.s32.totalorder %s19, 1
      %s286 = scalar_select %p285, %s19, 1
      %s287 = smul.addr %s286, 16
      %s288 = smul.addr %s287, 8
      %s289 = scalar_lea.vmem %s1, %s288
      %p290 = pneg %p66
      %p291 = pneg %p63
      %p292 = pneg %p87
      %p293 = pneg %p84
      %p294 = pneg %p108
      %p295 = pneg %p105
      %p296 = pneg %p129
      %p297 = pneg %p126
      %p298 = pneg %p150
      %p299 = pneg %p147
      %p300 = pneg %p171
      %p301 = pneg %p168
      %p302 = pneg %p192
      %p303 = pneg %p189
      %p304 = pneg %p218
      %p305 = pneg %p215
      %p306 = scmp.lt.s32.totalorder %s19, 1
      %s307 = scalar_select %p306, %s19, 1
      %s308 = smul.addr %s307, 16
      %s309 = smul.addr %s308, 8
      %s310 = scalar_lea.vmem %s8, %s309
      %p311 = scmp.lt.s32.totalorder %s19, 1
      %s312 = scalar_select %p311, %s19, 1
      %s313 = smul.addr %s312, 16
      %s314 = smul.addr %s313, 8
      %s315 = scalar_lea.vmem %s0, %s314
      %p316 = scmp.lt.s32.totalorder %s19, 1
      %s317 = scalar_select %p316, %s19, 1
      %s318 = smul.addr %s317, 16
      %s319 = smul.addr %s318, 8
      %s320 = scalar_lea.vmem %s1, %s319
      %p321 = scmp.lt.s32.totalorder %s19, 1
      %s322 = scalar_select %p321, %s19, 1
      %s323 = smul.addr %s322, 16
      %s324 = smul.addr %s323, 8
      %s325 = scalar_lea.vmem %s8, %s324
      %v327 = vld [vmem:[%s2] sm:$0xf]
      %v328 = vld [vmem:[%s2 + $0x4] sm:$0xf]
      %v329 = vld [vmem:[%s2 + $0x8] sm:$0xf]
      %v330 = vld [vmem:[%s2 + $0xc] sm:$0xf]
      %v331 = vld [vmem:[%s2 + $0x10] sm:$0xf]
      %v332 = vld [vmem:[%s2 + $0x14] sm:$0xf]
      %v333 = vld [vmem:[%s2 + $0x18] sm:$0xf]
      %v334 = vld [vmem:[%s2 + $0x1c] sm:$0xf]
      %v335 = vld [vmem:[%s2 + $0x20] sm:$0xf]
      %v336 = vld [vmem:[%s2 + $0x24] sm:$0xf]
      %v337 = vld [vmem:[%s2 + $0x28] sm:$0xf]
      %v338 = vld [vmem:[%s2 + $0x2c] sm:$0xf]
      %v339 = vld [vmem:[%s3] sm:$0xff]
      %v340 = vld [vmem:[%s3 + $0x8] sm:$0xff]
      %v341 = vld [vmem:[%s3 + $0x10] sm:$0xff]
      %v342 = vld [vmem:[%s3 + $0x18] sm:$0xff]
      %v343 = vld [vmem:[%s4] sm:$0xff]
      %v344 = vld [vmem:[%s4 + $0x8] sm:$0xff]
      %v345 = vld [vmem:[%s4 + $0x10] sm:$0xff]
      %v346 = vld [vmem:[%s4 + $0x18] sm:$0xff]
      %v347 = vld [vmem:[%s5] sm:$0xff]
      %v348 = vld [vmem:[%s5 + $0x8] sm:$0xff]
      %v349 = vld [vmem:[%s5 + $0x10] sm:$0xff]
      %v350 = vld [vmem:[%s5 + $0x18] sm:$0xff]
      %v351 = vld [vmem:[%s6] sm:$0xf]
      %v352 = vld [vmem:[%s6 + $0x4] sm:$0xf]
      %v353 = vld [vmem:[%s6 + $0x8] sm:$0xf]
      %v354 = vld [vmem:[%s6 + $0xc] sm:$0xf]
      %v355 = vld [vmem:[%s7] sm:$0xff]
      %v356 = vld [vmem:[%s7 + $0x8] sm:$0xff]
      %v357 = vld [vmem:[%s7 + $0x10] sm:$0xff]
      %v358 = vld [vmem:[%s7 + $0x18] sm:$0xff]
      %v359 = vld [vmem:[%s315] sm:$0xff]
      %v360 = vld [vmem:[%s315 + $0x8] sm:$0xff]
      %v361 = vld [vmem:[%s315 + $0x10] sm:$0xff]
      %v362 = vld [vmem:[%s315 + $0x18] sm:$0xff]
      %v363 = vld [vmem:[%s315 + $0x20] sm:$0xff]
      %v364 = vld [vmem:[%s315 + $0x28] sm:$0xff]
      %v365 = vld [vmem:[%s315 + $0x30] sm:$0xff]
      %v366 = vld [vmem:[%s315 + $0x38] sm:$0xff]
      %v367 = vld [vmem:[%s315 + $0x40] sm:$0xff]
      %v368 = vld [vmem:[%s315 + $0x48] sm:$0xff]
      %v369 = vld [vmem:[%s315 + $0x50] sm:$0xff]
      %v370 = vld [vmem:[%s315 + $0x58] sm:$0xff]
      %v371 = vld [vmem:[%s315 + $0x60] sm:$0xff]
      %v372 = vld [vmem:[%s315 + $0x68] sm:$0xff]
      %v373 = vld [vmem:[%s315 + $0x70] sm:$0xff]
      %v374 = vld [vmem:[%s315 + $0x78] sm:$0xff]
      %v375 = vpack.c.bf16 %v363, %v359
      %v376 = vpack.c.bf16 %v364, %v360
      %v377 = vpack.c.bf16 %v365, %v361
      %v378 = vpack.c.bf16 %v366, %v362
      %v379 = vpack.c.bf16 %v371, %v367
      %v380 = vpack.c.bf16 %v372, %v368
      %v381 = vpack.c.bf16 %v373, %v369
      %v382 = vpack.c.bf16 %v374, %v370
      %v383 = vld [vmem:[%s320] sm:$0xff]
      %v384 = vld [vmem:[%s320 + $0x8] sm:$0xff]
      %v385 = vld [vmem:[%s320 + $0x10] sm:$0xff]
      %v386 = vld [vmem:[%s320 + $0x18] sm:$0xff]
      %v387 = vld [vmem:[%s320 + $0x20] sm:$0xff]
      %v388 = vld [vmem:[%s320 + $0x28] sm:$0xff]
      %v389 = vld [vmem:[%s320 + $0x30] sm:$0xff]
      %v390 = vld [vmem:[%s320 + $0x38] sm:$0xff]
      %v391 = vld [vmem:[%s320 + $0x40] sm:$0xff]
      %v392 = vld [vmem:[%s320 + $0x48] sm:$0xff]
      %v393 = vld [vmem:[%s320 + $0x50] sm:$0xff]
      %v394 = vld [vmem:[%s320 + $0x58] sm:$0xff]
      %v395 = vld [vmem:[%s320 + $0x60] sm:$0xff]
      %v396 = vld [vmem:[%s320 + $0x68] sm:$0xff]
      %v397 = vld [vmem:[%s320 + $0x70] sm:$0xff]
      %v398 = vld [vmem:[%s320 + $0x78] sm:$0xff]
      %v399 = vpack.c.bf16 %v387, %v383
      %v400 = vpack.c.bf16 %v388, %v384
      %v401 = vpack.c.bf16 %v389, %v385
      %v402 = vpack.c.bf16 %v390, %v386
      %v403 = vpack.c.bf16 %v395, %v391
      %v404 = vpack.c.bf16 %v396, %v392
      %v405 = vpack.c.bf16 %v397, %v393
      %v406 = vpack.c.bf16 %v398, %v394
      %v419 = vunpack.c.l.b16 %v327
      %v420 = vunpack.c.l.b16 %v328
      %v421 = vunpack.c.l.b16 %v329
      %v422 = vunpack.c.l.b16 %v330
      %v423 = vunpack.c.l.b16 %v331
      %v424 = vunpack.c.l.b16 %v332
      %v425 = vunpack.c.l.b16 %v333
      %v426 = vunpack.c.l.b16 %v334
      %v427 = vunpack.c.l.b16 %v335
      %v428 = vunpack.c.l.b16 %v336
      %v429 = vunpack.c.l.b16 %v337
      %v430 = vunpack.c.l.b16 %v338
      %v431 = vpack.c.b16 %v420, %v419
      %v432 = vpack.c.b16 %v422, %v421
      %v433 = vpack.c.b16 %v424, %v423
      %v434 = vpack.c.b16 %v426, %v425
      %v435 = vpack.c.b16 %v428, %v427
      %v436 = vpack.c.b16 %v430, %v429
      %vm437 = vcmask 261120
      %v439 = vsel %vm437, %v431, 0
      %v442 = vsel %vm437, %v432, 0
      %v445 = vsel %vm437, %v433, 0
      %v448 = vsel %vm437, %v434, 0
      %v451 = vsel %vm437, %v435, 0
      %v454 = vsel %vm437, %v436, 0
      %456 = vmatprep.subr.bf16.mxu0 %v376
      %457 = vmatpush1.bf16.msra.mxu0 %v375
      %458 = vmatprep.subr.bf16.mxu0 %v380
      %459 = vmatpush1.bf16.msra.mxu0 %v379
      %460 = vmatprep.subr.bf16.mxu0 0
      %461 = vmatpush1.bf16.msra.mxu0 0
      %462 = vmatprep.subr.bf16.mxu0 0
      %463 = vmatpush1.bf16.msra.mxu0 0
      %464 = vmatprep.subr.bf16.mxu0 0
      %465 = vmatpush1.bf16.msra.mxu0 0
      %466 = vmatprep.subr.bf16.mxu0 0
      %467 = vmatpush1.bf16.msra.mxu0 0
      %468 = vmatprep.subr.bf16.mxu0 0
      %469 = vmatpush1.bf16.msra.mxu0 0
      %470 = vmatprep.subr.bf16.mxu0 0
      %471 = vmatpush1.bf16.msra.mxu0 0
      %472 = vmatprep.subr.bf16.mxu0 0
      %473 = vmatpush1.bf16.msra.mxu0 0
      %474 = vmatprep.subr.bf16.mxu0 0
      %475 = vmatpush1.bf16.msra.mxu0 0
      %476 = vmatprep.subr.bf16.mxu0 0
      %477 = vmatpush1.bf16.msra.mxu0 0
      %478 = vmatprep.subr.bf16.mxu0 0
      %479 = vmatpush1.bf16.msra.mxu0 0
      %480 = vmatprep.subr.bf16.mxu0 0
      %481 = vmatpush1.bf16.msra.mxu0 0
      %482 = vmatprep.subr.bf16.mxu0 0
      %483 = vmatpush1.bf16.msra.mxu0 0
      %484 = vmatprep.subr.bf16.mxu0 0
      %485 = vmatpush1.bf16.msra.mxu0 0
      %486 = vmatprep.subr.bf16.mxu0 0
      %487 = vmatpush1.bf16.msra.mxu0 0
      %488 = vmatprep.mubr.bf16.mxu0 0
      %489 = vmatmul.mubr.bf16.gmra.mrb[0].mxu0 %v439
      %v490 = vpop.f32.mrb[0].mxu0
      %v491 = vadd.f32 0.0, %v490
      %v492 = vpop.f32.mrb[0].mxu0
      %v493 = vadd.f32 0.0, %v492
      %v494 = vpop.f32.mrb[0].mxu0
      %v495 = vadd.f32 0.0, %v494
      %v496 = vpop.f32.mrb[0].mxu0
      %v497 = vadd.f32 0.0, %v496
      %498 = vmatprep.mubr.bf16.mxu0 0
      %499 = vmatmul.mubr.bf16.gmra.mrb[0].mxu0 %v442
      %v500 = vpop.f32.mrb[0].mxu0
      %v501 = vadd.f32 0.0, %v500
      %v502 = vpop.f32.mrb[0].mxu0
      %v503 = vadd.f32 0.0, %v502
      %v504 = vpop.f32.mrb[0].mxu0
      %v505 = vadd.f32 0.0, %v504
      %v506 = vpop.f32.mrb[0].mxu0
      %v507 = vadd.f32 0.0, %v506
      %508 = vmatprep.mubr.bf16.mxu0 0
      %509 = vmatmul.mubr.bf16.gmra.mrb[0].mxu0 %v445
      %v510 = vpop.f32.mrb[0].mxu0
      %v511 = vadd.f32 0.0, %v510
      %v512 = vpop.f32.mrb[0].mxu0
      %v513 = vadd.f32 0.0, %v512
      %v514 = vpop.f32.mrb[0].mxu0
      %v515 = vadd.f32 0.0, %v514
      %v516 = vpop.f32.mrb[0].mxu0
      %v517 = vadd.f32 0.0, %v516
      %518 = vmatprep.mubr.bf16.mxu0 0
      %519 = vmatmul.mubr.bf16.gmra.mrb[0].mxu0 %v448
      %v520 = vpop.f32.mrb[0].mxu0
      %v521 = vadd.f32 0.0, %v520
      %v522 = vpop.f32.mrb[0].mxu0
      %v523 = vadd.f32 0.0, %v522
      %v524 = vpop.f32.mrb[0].mxu0
      %v525 = vadd.f32 0.0, %v524
      %v526 = vpop.f32.mrb[0].mxu0
      %v527 = vadd.f32 0.0, %v526
      %528 = vmatprep.mubr.bf16.mxu0 0
      %529 = vmatmul.mubr.bf16.gmra.mrb[0].mxu0 %v451
      %v530 = vpop.f32.mrb[0].mxu0
      %v531 = vadd.f32 0.0, %v530
      %v532 = vpop.f32.mrb[0].mxu0
      %v533 = vadd.f32 0.0, %v532
      %v534 = vpop.f32.mrb[0].mxu0
      %v535 = vadd.f32 0.0, %v534
      %v536 = vpop.f32.mrb[0].mxu0
      %v537 = vadd.f32 0.0, %v536
      %538 = vmatprep.mubr.bf16.mxu0 0
      %539 = vmatmul.mubr.bf16.gmra.mrb[0].mxu0 %v454
      %v540 = vpop.f32.mrb[0].mxu0
      %v541 = vadd.f32 0.0, %v540
      %v542 = vpop.f32.mrb[0].mxu0
      %v543 = vadd.f32 0.0, %v542
      %v544 = vpop.f32.mrb[0].mxu0
      %v545 = vadd.f32 0.0, %v544
      %v546 = vpop.f32.mrb[0].mxu0
      %v547 = vadd.f32 0.0, %v546
      %548 = vdwg.mxu0
      %549 = vmatprep.subr.bf16.mxu0 %v378
      %550 = vmatpush1.bf16.msra.mxu0 %v377
      %551 = vmatprep.subr.bf16.mxu0 %v382
      %552 = vmatpush1.bf16.msra.mxu0 %v381
      %553 = vmatprep.subr.bf16.mxu0 0
      %554 = vmatpush1.bf16.msra.mxu0 0
      %555 = vmatprep.subr.bf16.mxu0 0
      %556 = vmatpush1.bf16.msra.mxu0 0
      %557 = vmatprep.subr.bf16.mxu0 0
      %558 = vmatpush1.bf16.msra.mxu0 0
      %559 = vmatprep.subr.bf16.mxu0 0
      %560 = vmatpush1.bf16.msra.mxu0 0
      %561 = vmatprep.subr.bf16.mxu0 0
      %562 = vmatpush1.bf16.msra.mxu0 0
      %563 = vmatprep.subr.bf16.mxu0 0
      %564 = vmatpush1.bf16.msra.mxu0 0
      %565 = vmatprep.subr.bf16.mxu0 0
      %566 = vmatpush1.bf16.msra.mxu0 0
      %567 = vmatprep.subr.bf16.mxu0 0
      %568 = vmatpush1.bf16.msra.mxu0 0
      %569 = vmatprep.subr.bf16.mxu0 0
      %570 = vmatpush1.bf16.msra.mxu0 0
      %571 = vmatprep.subr.bf16.mxu0 0
      %572 = vmatpush1.bf16.msra.mxu0 0
      %573 = vmatprep.subr.bf16.mxu0 0
      %574 = vmatpush1.bf16.msra.mxu0 0
      %575 = vmatprep.subr.bf16.mxu0 0
      %576 = vmatpush1.bf16.msra.mxu0 0
      %577 = vmatprep.subr.bf16.mxu0 0
      %578 = vmatpush1.bf16.msra.mxu0 0
      %579 = vmatprep.subr.bf16.mxu0 0
      %580 = vmatpush1.bf16.msra.mxu0 0
      %581 = vmatprep.mubr.bf16.mxu0 0
      %582 = vmatmul.mubr.bf16.gmra.mrb[0].mxu0 %v439
      %v583 = vpop.f32.mrb[0].mxu0
      %v584 = vadd.f32 0.0, %v583
      %v585 = vpop.f32.mrb[0].mxu0
      %v586 = vadd.f32 0.0, %v585
      %v587 = vpop.f32.mrb[0].mxu0
      %v588 = vadd.f32 0.0, %v587
      %v589 = vpop.f32.mrb[0].mxu0
      %v590 = vadd.f32 0.0, %v589
      %591 = vmatprep.mubr.bf16.mxu0 0
      %592 = vmatmul.mubr.bf16.gmra.mrb[0].mxu0 %v442
      %v593 = vpop.f32.mrb[0].mxu0
      %v594 = vadd.f32 0.0, %v593
      %v595 = vpop.f32.mrb[0].mxu0
      %v596 = vadd.f32 0.0, %v595
      %v597 = vpop.f32.mrb[0].mxu0
      %v598 = vadd.f32 0.0, %v597
      %v599 = vpop.f32.mrb[0].mxu0
      %v600 = vadd.f32 0.0, %v599
      %601 = vmatprep.mubr.bf16.mxu0 0
      %602 = vmatmul.mubr.bf16.gmra.mrb[0].mxu0 %v445
      %v603 = vpop.f32.mrb[0].mxu0
      %v604 = vadd.f32 0.0, %v603
      %v605 = vpop.f32.mrb[0].mxu0
      %v606 = vadd.f32 0.0, %v605
      %v607 = vpop.f32.mrb[0].mxu0
      %v608 = vadd.f32 0.0, %v607
      %v609 = vpop.f32.mrb[0].mxu0
      %v610 = vadd.f32 0.0, %v609
      %611 = vmatprep.mubr.bf16.mxu0 0
      %612 = vmatmul.mubr.bf16.gmra.mrb[0].mxu0 %v448
      %v613 = vpop.f32.mrb[0].mxu0
      %v614 = vadd.f32 0.0, %v613
      %v615 = vpop.f32.mrb[0].mxu0
      %v616 = vadd.f32 0.0, %v615
      %v617 = vpop.f32.mrb[0].mxu0
      %v618 = vadd.f32 0.0, %v617
      %v619 = vpop.f32.mrb[0].mxu0
      %v620 = vadd.f32 0.0, %v619
      %621 = vmatprep.mubr.bf16.mxu0 0
      %622 = vmatmul.mubr.bf16.gmra.mrb[0].mxu0 %v451
      %v623 = vpop.f32.mrb[0].mxu0
      %v624 = vadd.f32 0.0, %v623
      %v625 = vpop.f32.mrb[0].mxu0
      %v626 = vadd.f32 0.0, %v625
      %v627 = vpop.f32.mrb[0].mxu0
      %v628 = vadd.f32 0.0, %v627
      %v629 = vpop.f32.mrb[0].mxu0
      %v630 = vadd.f32 0.0, %v629
      %631 = vmatprep.mubr.bf16.mxu0 0
      %632 = vmatmul.mubr.bf16.gmra.mrb[0].mxu0 %v454
      %v633 = vpop.f32.mrb[0].mxu0
      %v634 = vadd.f32 0.0, %v633
      %v635 = vpop.f32.mrb[0].mxu0
      %v636 = vadd.f32 0.0, %v635
      %v637 = vpop.f32.mrb[0].mxu0
      %v638 = vadd.f32 0.0, %v637
      %v639 = vpop.f32.mrb[0].mxu0
      %v640 = vadd.f32 0.0, %v639
      %641 = vdwg.mxu0
      %642 = vmatprep.subr.bf16.mxu0 %v400
      %643 = vmatpush1.bf16.msra.mxu0 %v399
      %644 = vmatprep.subr.bf16.mxu0 %v404
      %645 = vmatpush1.bf16.msra.mxu0 %v403
      %646 = vmatprep.subr.bf16.mxu0 0
      %647 = vmatpush1.bf16.msra.mxu0 0
      %648 = vmatprep.subr.bf16.mxu0 0
      %649 = vmatpush1.bf16.msra.mxu0 0
      %650 = vmatprep.subr.bf16.mxu0 0
      %651 = vmatpush1.bf16.msra.mxu0 0
      %652 = vmatprep.subr.bf16.mxu0 0
      %653 = vmatpush1.bf16.msra.mxu0 0
      %654 = vmatprep.subr.bf16.mxu0 0
      %655 = vmatpush1.bf16.msra.mxu0 0
      %656 = vmatprep.subr.bf16.mxu0 0
      %657 = vmatpush1.bf16.msra.mxu0 0
      %658 = vmatprep.subr.bf16.mxu0 0
      %659 = vmatpush1.bf16.msra.mxu0 0
      %660 = vmatprep.subr.bf16.mxu0 0
      %661 = vmatpush1.bf16.msra.mxu0 0
      %662 = vmatprep.subr.bf16.mxu0 0
      %663 = vmatpush1.bf16.msra.mxu0 0
      %664 = vmatprep.subr.bf16.mxu0 0
      %665 = vmatpush1.bf16.msra.mxu0 0
      %666 = vmatprep.subr.bf16.mxu0 0
      %667 = vmatpush1.bf16.msra.mxu0 0
      %668 = vmatprep.subr.bf16.mxu0 0
      %669 = vmatpush1.bf16.msra.mxu0 0
      %670 = vmatprep.subr.bf16.mxu0 0
      %671 = vmatpush1.bf16.msra.mxu0 0
      %672 = vmatprep.subr.bf16.mxu0 0
      %673 = vmatpush1.bf16.msra.mxu0 0
      %674 = vmatprep.mubr.bf16.mxu0 0
      %675 = vmatmul.mubr.bf16.gmra.mrb[0].mxu0 %v439
      %v676 = vpop.f32.mrb[0].mxu0
      %v677 = vadd.f32 0.0, %v676
      %v678 = vpop.f32.mrb[0].mxu0
      %v679 = vadd.f32 0.0, %v678
      %v680 = vpop.f32.mrb[0].mxu0
      %v681 = vadd.f32 0.0, %v680
      %v682 = vpop.f32.mrb[0].mxu0
      %v683 = vadd.f32 0.0, %v682
      %684 = vmatprep.mubr.bf16.mxu0 0
      %685 = vmatmul.mubr.bf16.gmra.mrb[0].mxu0 %v442
      %v686 = vpop.f32.mrb[0].mxu0
      %v687 = vadd.f32 0.0, %v686
      %v688 = vpop.f32.mrb[0].mxu0
      %v689 = vadd.f32 0.0, %v688
      %v690 = vpop.f32.mrb[0].mxu0
      %v691 = vadd.f32 0.0, %v690
      %v692 = vpop.f32.mrb[0].mxu0
      %v693 = vadd.f32 0.0, %v692
      %694 = vmatprep.mubr.bf16.mxu0 0
      %695 = vmatmul.mubr.bf16.gmra.mrb[0].mxu0 %v445
      %v696 = vpop.f32.mrb[0].mxu0
      %v697 = vadd.f32 0.0, %v696
      %v698 = vpop.f32.mrb[0].mxu0
      %v699 = vadd.f32 0.0, %v698
      %v700 = vpop.f32.mrb[0].mxu0
      %v701 = vadd.f32 0.0, %v700
      %v702 = vpop.f32.mrb[0].mxu0
      %v703 = vadd.f32 0.0, %v702
      %704 = vmatprep.mubr.bf16.mxu0 0
      %705 = vmatmul.mubr.bf16.gmra.mrb[0].mxu0 %v448
      %v706 = vpop.f32.mrb[0].mxu0
      %v707 = vadd.f32 0.0, %v706
      %v708 = vpop.f32.mrb[0].mxu0
      %v709 = vadd.f32 0.0, %v708
      %v710 = vpop.f32.mrb[0].mxu0
      %v711 = vadd.f32 0.0, %v710
      %v712 = vpop.f32.mrb[0].mxu0
      %v713 = vadd.f32 0.0, %v712
      %714 = vmatprep.mubr.bf16.mxu0 0
      %715 = vmatmul.mubr.bf16.gmra.mrb[0].mxu0 %v451
      %v716 = vpop.f32.mrb[0].mxu0
      %v717 = vadd.f32 0.0, %v716
      %v718 = vpop.f32.mrb[0].mxu0
      %v719 = vadd.f32 0.0, %v718
      %v720 = vpop.f32.mrb[0].mxu0
      %v721 = vadd.f32 0.0, %v720
      %v722 = vpop.f32.mrb[0].mxu0
      %v723 = vadd.f32 0.0, %v722
      %724 = vmatprep.mubr.bf16.mxu0 0
      %725 = vmatmul.mubr.bf16.gmra.mrb[0].mxu0 %v454
      %v726 = vpop.f32.mrb[0].mxu0
      %v727 = vadd.f32 0.0, %v726
      %v728 = vpop.f32.mrb[0].mxu0
      %v729 = vadd.f32 0.0, %v728
      %v730 = vpop.f32.mrb[0].mxu0
      %v731 = vadd.f32 0.0, %v730
      %v732 = vpop.f32.mrb[0].mxu0
      %v733 = vadd.f32 0.0, %v732
      %734 = vdwg.mxu0
      %735 = vmatprep.subr.bf16.mxu0 %v402
      %736 = vmatpush1.bf16.msra.mxu0 %v401
      %737 = vmatprep.subr.bf16.mxu0 %v406
      %738 = vmatpush1.bf16.msra.mxu0 %v405
      %739 = vmatprep.subr.bf16.mxu0 0
      %740 = vmatpush1.bf16.msra.mxu0 0
      %741 = vmatprep.subr.bf16.mxu0 0
      %742 = vmatpush1.bf16.msra.mxu0 0
      %743 = vmatprep.subr.bf16.mxu0 0
      %744 = vmatpush1.bf16.msra.mxu0 0
      %745 = vmatprep.subr.bf16.mxu0 0
      %746 = vmatpush1.bf16.msra.mxu0 0
      %747 = vmatprep.subr.bf16.mxu0 0
      %748 = vmatpush1.bf16.msra.mxu0 0
      %749 = vmatprep.subr.bf16.mxu0 0
      %750 = vmatpush1.bf16.msra.mxu0 0
      %751 = vmatprep.subr.bf16.mxu0 0
      %752 = vmatpush1.bf16.msra.mxu0 0
      %753 = vmatprep.subr.bf16.mxu0 0
      %754 = vmatpush1.bf16.msra.mxu0 0
      %755 = vmatprep.subr.bf16.mxu0 0
      %756 = vmatpush1.bf16.msra.mxu0 0
      %757 = vmatprep.subr.bf16.mxu0 0
      %758 = vmatpush1.bf16.msra.mxu0 0
      %759 = vmatprep.subr.bf16.mxu0 0
      %760 = vmatpush1.bf16.msra.mxu0 0
      %761 = vmatprep.subr.bf16.mxu0 0
      %762 = vmatpush1.bf16.msra.mxu0 0
      %763 = vmatprep.subr.bf16.mxu0 0
      %764 = vmatpush1.bf16.msra.mxu0 0
      %765 = vmatprep.subr.bf16.mxu0 0
      %766 = vmatpush1.bf16.msra.mxu0 0
      %767 = vmatprep.mubr.bf16.mxu0 0
      %768 = vmatmul.mubr.bf16.gmra.mrb[0].mxu0 %v439
      %v769 = vpop.f32.mrb[0].mxu0
      %v770 = vadd.f32 0.0, %v769
      %v771 = vpop.f32.mrb[0].mxu0
      %v772 = vadd.f32 0.0, %v771
      %v773 = vpop.f32.mrb[0].mxu0
      %v774 = vadd.f32 0.0, %v773
      %v775 = vpop.f32.mrb[0].mxu0
      %v776 = vadd.f32 0.0, %v775
      %777 = vmatprep.mubr.bf16.mxu0 0
      %778 = vmatmul.mubr.bf16.gmra.mrb[0].mxu0 %v442
      %v779 = vpop.f32.mrb[0].mxu0
      %v780 = vadd.f32 0.0, %v779
      %v781 = vpop.f32.mrb[0].mxu0
      %v782 = vadd.f32 0.0, %v781
      %v783 = vpop.f32.mrb[0].mxu0
      %v784 = vadd.f32 0.0, %v783
      %v785 = vpop.f32.mrb[0].mxu0
      %v786 = vadd.f32 0.0, %v785
      %787 = vmatprep.mubr.bf16.mxu0 0
      %788 = vmatmul.mubr.bf16.gmra.mrb[0].mxu0 %v445
      %v789 = vpop.f32.mrb[0].mxu0
      %v790 = vadd.f32 0.0, %v789
      %v791 = vpop.f32.mrb[0].mxu0
      %v792 = vadd.f32 0.0, %v791
      %v793 = vpop.f32.mrb[0].mxu0
      %v794 = vadd.f32 0.0, %v793
      %v795 = vpop.f32.mrb[0].mxu0
      %v796 = vadd.f32 0.0, %v795
      %797 = vmatprep.mubr.bf16.mxu0 0
      %798 = vmatmul.mubr.bf16.gmra.mrb[0].mxu0 %v448
      %v799 = vpop.f32.mrb[0].mxu0
      %v800 = vadd.f32 0.0, %v799
      %v801 = vpop.f32.mrb[0].mxu0
      %v802 = vadd.f32 0.0, %v801
      %v803 = vpop.f32.mrb[0].mxu0
      %v804 = vadd.f32 0.0, %v803
      %v805 = vpop.f32.mrb[0].mxu0
      %v806 = vadd.f32 0.0, %v805
      %807 = vmatprep.mubr.bf16.mxu0 0
      %808 = vmatmul.mubr.bf16.gmra.mrb[0].mxu0 %v451
      %v809 = vpop.f32.mrb[0].mxu0
      %v810 = vadd.f32 0.0, %v809
      %v811 = vpop.f32.mrb[0].mxu0
      %v812 = vadd.f32 0.0, %v811
      %v813 = vpop.f32.mrb[0].mxu0
      %v814 = vadd.f32 0.0, %v813
      %v815 = vpop.f32.mrb[0].mxu0
      %v816 = vadd.f32 0.0, %v815
      %817 = vmatprep.mubr.bf16.mxu0 0
      %818 = vmatmul.mubr.bf16.gmra.mrb[0].mxu0 %v454
      %v819 = vpop.f32.mrb[0].mxu0
      %v820 = vadd.f32 0.0, %v819
      %v821 = vpop.f32.mrb[0].mxu0
      %v822 = vadd.f32 0.0, %v821
      %v823 = vpop.f32.mrb[0].mxu0
      %v824 = vadd.f32 0.0, %v823
      %v825 = vpop.f32.mrb[0].mxu0
      %v826 = vadd.f32 0.0, %v825
      %827 = vdwg.mxu0
      %v828 = vmul.f32 %v491, %v491
      %v829 = vmul.f32 %v493, %v493
      %v830 = vmul.f32 %v584, %v584
      %v831 = vmul.f32 %v586, %v586
      %v832 = vmul.f32 %v495, %v495
      %v833 = vmul.f32 %v497, %v497
      %v834 = vmul.f32 %v588, %v588
      %v835 = vmul.f32 %v590, %v590
      %v836 = vmul.f32 %v501, %v501
      %v837 = vmul.f32 %v503, %v503
      %v838 = vmul.f32 %v594, %v594
      %v839 = vmul.f32 %v596, %v596
      %v840 = vmul.f32 %v505, %v505
      %v841 = vmul.f32 %v507, %v507
      %v842 = vmul.f32 %v598, %v598
      %v843 = vmul.f32 %v600, %v600
      %v844 = vadd.f32 %v828, %v829
      %v845 = vadd.f32 %v844, %v830
      %v846 = vadd.f32 %v845, %v831
      %847 = vadd.xlane.f32.xlu0 %v846
      %v848 = vpop.xlane.xlu0 %847
      %v849 = vadd.f32 %v832, %v833
      %v850 = vadd.f32 %v849, %v834
      %v851 = vadd.f32 %v850, %v835
      %852 = vadd.xlane.f32.xlu0 %v851
      %v853 = vpop.xlane.xlu0 %852
      %v854 = vadd.f32 %v836, %v837
      %v855 = vadd.f32 %v854, %v838
      %v856 = vadd.f32 %v855, %v839
      %857 = vadd.xlane.f32.xlu0 %v856
      %v858 = vpop.xlane.xlu0 %857
      %v859 = vadd.f32 %v840, %v841
      %v860 = vadd.f32 %v859, %v842
      %v861 = vadd.f32 %v860, %v843
      %862 = vadd.xlane.f32.xlu0 %v861
      %v863 = vpop.xlane.xlu0 %862
      %v864 = vmax.f32 %v848, 1e-24
      %v865 = vmax.f32 %v853, 1e-24
      %v866 = vmax.f32 %v858, 1e-24
      %v867 = vmax.f32 %v863, 1e-24
      %v868 = vrsqrt.pop %v864
      %v869 = vrsqrt.pop %v865
      %v870 = vrsqrt.pop %v866
      %v871 = vrsqrt.pop %v867
      %v872 = vmul.f32 %v491, %v868
      %v873 = vmul.f32 %v493, %v868
      %v874 = vmul.f32 %v584, %v868
      %v875 = vmul.f32 %v586, %v868
      %v876 = vmul.f32 %v495, %v869
      %v877 = vmul.f32 %v497, %v869
      %v878 = vmul.f32 %v588, %v869
      %v879 = vmul.f32 %v590, %v869
      %v880 = vmul.f32 %v501, %v870
      %v881 = vmul.f32 %v503, %v870
      %v882 = vmul.f32 %v594, %v870
      %v883 = vmul.f32 %v596, %v870
      %v884 = vmul.f32 %v505, %v871
      %v885 = vmul.f32 %v507, %v871
      %v886 = vmul.f32 %v598, %v871
      %v887 = vmul.f32 %v600, %v871
      %v888 = vmul.f32 %v511, %v511
      %v889 = vmul.f32 %v513, %v513
      %v890 = vmul.f32 %v604, %v604
      %v891 = vmul.f32 %v606, %v606
      %v892 = vmul.f32 %v515, %v515
      %v893 = vmul.f32 %v517, %v517
      %v894 = vmul.f32 %v608, %v608
      %v895 = vmul.f32 %v610, %v610
      %v896 = vmul.f32 %v521, %v521
      %v897 = vmul.f32 %v523, %v523
      %v898 = vmul.f32 %v614, %v614
      %v899 = vmul.f32 %v616, %v616
      %v900 = vmul.f32 %v525, %v525
      %v901 = vmul.f32 %v527, %v527
      %v902 = vmul.f32 %v618, %v618
      %v903 = vmul.f32 %v620, %v620
      %v904 = vadd.f32 %v888, %v889
      %v905 = vadd.f32 %v904, %v890
      %v906 = vadd.f32 %v905, %v891
      %907 = vadd.xlane.f32.xlu0 %v906
      %v908 = vpop.xlane.xlu0 %907
      %v909 = vadd.f32 %v892, %v893
      %v910 = vadd.f32 %v909, %v894
      %v911 = vadd.f32 %v910, %v895
      %912 = vadd.xlane.f32.xlu0 %v911
      %v913 = vpop.xlane.xlu0 %912
      %v914 = vadd.f32 %v896, %v897
      %v915 = vadd.f32 %v914, %v898
      %v916 = vadd.f32 %v915, %v899
      %917 = vadd.xlane.f32.xlu0 %v916
      %v918 = vpop.xlane.xlu0 %917
      %v919 = vadd.f32 %v900, %v901
      %v920 = vadd.f32 %v919, %v902
      %v921 = vadd.f32 %v920, %v903
      %922 = vadd.xlane.f32.xlu0 %v921
      %v923 = vpop.xlane.xlu0 %922
      %v924 = vmax.f32 %v908, 1e-24
      %v925 = vmax.f32 %v913, 1e-24
      %v926 = vmax.f32 %v918, 1e-24
      %v927 = vmax.f32 %v923, 1e-24
      %v928 = vrsqrt.pop %v924
      %v929 = vrsqrt.pop %v925
      %v930 = vrsqrt.pop %v926
      %v931 = vrsqrt.pop %v927
      %v932 = vmul.f32 %v511, %v928
      %v933 = vmul.f32 %v513, %v928
      %v934 = vmul.f32 %v604, %v928
      %v935 = vmul.f32 %v606, %v928
      %v936 = vmul.f32 %v515, %v929
      %v937 = vmul.f32 %v517, %v929
      %v938 = vmul.f32 %v608, %v929
      %v939 = vmul.f32 %v610, %v929
      %v940 = vmul.f32 %v521, %v930
      %v941 = vmul.f32 %v523, %v930
      %v942 = vmul.f32 %v614, %v930
      %v943 = vmul.f32 %v616, %v930
      %v944 = vmul.f32 %v525, %v931
      %v945 = vmul.f32 %v527, %v931
      %v946 = vmul.f32 %v618, %v931
      %v947 = vmul.f32 %v620, %v931
      %948 = vmatprep.subr.mxu0 %v933
      %949 = vmatpush1.xpose.msra.mxu0 %v932
      %950 = vmatprep.subr.mxu0 %v937
      %951 = vmatpush1.xpose.msra.mxu0 %v936
      %952 = vmatprep.subr.mxu0 %v941
      %953 = vmatpush1.xpose.msra.mxu0 %v940
      %954 = vmatprep.subr.mxu0 %v945
      %955 = vmatpush1.xpose.msra.mxu0 %v944
      %956 = vmatprep.subr.mxu0 0.0
      %957 = vmatpush1.xpose.msra.mxu0 0.0
      %958 = vmatprep.subr.mxu0 0.0
      %959 = vmatpush1.xpose.msra.mxu0 0.0
      %960 = vmatprep.subr.mxu0 0.0
      %961 = vmatpush1.xpose.msra.mxu0 0.0
      %962 = vmatprep.subr.mxu0 0.0
      %963 = vmatpush1.xpose.msra.mxu0 0.0
      %964 = vmatprep.subr.mxu0 0.0
      %965 = vmatpush1.xpose.msra.mxu0 0.0
      %966 = vmatprep.subr.mxu0 0.0
      %967 = vmatpush1.xpose.msra.mxu0 0.0
      %968 = vmatprep.subr.mxu0 0.0
      %969 = vmatpush1.xpose.msra.mxu0 0.0
      %970 = vmatprep.subr.mxu0 0.0
      %971 = vmatpush1.xpose.msra.mxu0 0.0
      %972 = vmatprep.subr.mxu0 0.0
      %973 = vmatpush1.xpose.msra.mxu0 0.0
      %974 = vmatprep.subr.mxu0 0.0
      %975 = vmatpush1.xpose.msra.mxu0 0.0
      %976 = vmatprep.subr.mxu0 0.0
      %977 = vmatpush1.xpose.msra.mxu0 0.0
      %978 = vmatprep.subr.mxu0 0.0
      %979 = vmatpush1.xpose.msra.mxu0 0.0
      %980 = vmatprep.subr.mxu0 0.0
      %981 = vmatpush1.xpose.msra.mxu0 0.0
      %982 = vmatprep.subr.mxu0 0.0
      %983 = vmatpush1.xpose.msra.mxu0 0.0
      %984 = vmatprep.subr.mxu0 0.0
      %985 = vmatpush1.xpose.msra.mxu0 0.0
      %986 = vmatprep.subr.mxu0 0.0
      %987 = vmatpush1.xpose.msra.mxu0 0.0
      %988 = vmatprep.subr.mxu0 0.0
      %989 = vmatpush1.xpose.msra.mxu0 0.0
      %990 = vmatprep.subr.mxu0 0.0
      %991 = vmatpush1.xpose.msra.mxu0 0.0
      %992 = vmatprep.subr.mxu0 0.0
      %993 = vmatpush1.xpose.msra.mxu0 0.0
      %994 = vmatprep.subr.mxu0 0.0
      %995 = vmatpush1.xpose.msra.mxu0 0.0
      %996 = vmatprep.subr.mxu0 0.0
      %997 = vmatpush1.xpose.msra.mxu0 0.0
      %998 = vmatprep.subr.mxu0 0.0
      %999 = vmatpush1.xpose.msra.mxu0 0.0
      %1000 = vmatprep.subr.mxu0 0.0
      %1001 = vmatpush1.xpose.msra.mxu0 0.0
      %1002 = vmatprep.subr.mxu0 0.0
      %1003 = vmatpush1.xpose.msra.mxu0 0.0
      %1004 = vmatprep.subr.mxu0 0.0
      %1005 = vmatpush1.xpose.msra.mxu0 0.0
      %1006 = vmatprep.subr.mxu0 0.0
      %1007 = vmatpush1.xpose.msra.mxu0 0.0
      %1008 = vmatprep.subr.mxu0 0.0
      %1009 = vmatpush1.xpose.msra.mxu0 0.0
      %1010 = vmatprep.subr.mxu0 0.0
      %1011 = vmatpush1.xpose.msra.mxu0 0.0
      %1012 = vmatprep.mubr.f32.mxu0 %v873
      %1013 = vmatmul.mubr.f32.gmra.mrb[0].mxu0 %v872
      %v1014 = vpop.f32.mrb[0].mxu0
      %v1015 = vadd.f32 0.0, %v1014
      %v1016 = vpop.f32.mrb[0].mxu0
      %1017 = vmatprep.mubr.f32.mxu0 %v877
      %1018 = vmatmul.mubr.f32.gmra.mrb[0].mxu0 %v876
      %v1019 = vpop.f32.mrb[0].mxu0
      %v1020 = vadd.f32 0.0, %v1019
      %v1021 = vpop.f32.mrb[0].mxu0
      %1022 = vmatprep.mubr.f32.mxu0 %v881
      %1023 = vmatmul.mubr.f32.gmra.mrb[0].mxu0 %v880
      %v1024 = vpop.f32.mrb[0].mxu0
      %v1025 = vadd.f32 0.0, %v1024
      %v1026 = vpop.f32.mrb[0].mxu0
      %1027 = vmatprep.mubr.f32.mxu0 %v885
      %1028 = vmatmul.mubr.f32.gmra.mrb[0].mxu0 %v884
      %v1029 = vpop.f32.mrb[0].mxu0
      %v1030 = vadd.f32 0.0, %v1029
      %v1031 = vpop.f32.mrb[0].mxu0
      %1032 = vdwg.mxu0
      %1033 = vmatprep.subr.mxu0 %v935
      %1034 = vmatpush1.xpose.msra.mxu0 %v934
      %1035 = vmatprep.subr.mxu0 %v939
      %1036 = vmatpush1.xpose.msra.mxu0 %v938
      %1037 = vmatprep.subr.mxu0 %v943
      %1038 = vmatpush1.xpose.msra.mxu0 %v942
      %1039 = vmatprep.subr.mxu0 %v947
      %1040 = vmatpush1.xpose.msra.mxu0 %v946
      %1041 = vmatprep.subr.mxu0 0.0
      %1042 = vmatpush1.xpose.msra.mxu0 0.0
      %1043 = vmatprep.subr.mxu0 0.0
      %1044 = vmatpush1.xpose.msra.mxu0 0.0
      %1045 = vmatprep.subr.mxu0 0.0
      %1046 = vmatpush1.xpose.msra.mxu0 0.0
      %1047 = vmatprep.subr.mxu0 0.0
      %1048 = vmatpush1.xpose.msra.mxu0 0.0
      %1049 = vmatprep.subr.mxu0 0.0
      %1050 = vmatpush1.xpose.msra.mxu0 0.0
      %1051 = vmatprep.subr.mxu0 0.0
      %1052 = vmatpush1.xpose.msra.mxu0 0.0
      %1053 = vmatprep.subr.mxu0 0.0
      %1054 = vmatpush1.xpose.msra.mxu0 0.0
      %1055 = vmatprep.subr.mxu0 0.0
      %1056 = vmatpush1.xpose.msra.mxu0 0.0
      %1057 = vmatprep.subr.mxu0 0.0
      %1058 = vmatpush1.xpose.msra.mxu0 0.0
      %1059 = vmatprep.subr.mxu0 0.0
      %1060 = vmatpush1.xpose.msra.mxu0 0.0
      %1061 = vmatprep.subr.mxu0 0.0
      %1062 = vmatpush1.xpose.msra.mxu0 0.0
      %1063 = vmatprep.subr.mxu0 0.0
      %1064 = vmatpush1.xpose.msra.mxu0 0.0
      %1065 = vmatprep.subr.mxu0 0.0
      %1066 = vmatpush1.xpose.msra.mxu0 0.0
      %1067 = vmatprep.subr.mxu0 0.0
      %1068 = vmatpush1.xpose.msra.mxu0 0.0
      %1069 = vmatprep.subr.mxu0 0.0
      %1070 = vmatpush1.xpose.msra.mxu0 0.0
      %1071 = vmatprep.subr.mxu0 0.0
      %1072 = vmatpush1.xpose.msra.mxu0 0.0
      %1073 = vmatprep.subr.mxu0 0.0
      %1074 = vmatpush1.xpose.msra.mxu0 0.0
      %1075 = vmatprep.subr.mxu0 0.0
      %1076 = vmatpush1.xpose.msra.mxu0 0.0
      %1077 = vmatprep.subr.mxu0 0.0
      %1078 = vmatpush1.xpose.msra.mxu0 0.0
      %1079 = vmatprep.subr.mxu0 0.0
      %1080 = vmatpush1.xpose.msra.mxu0 0.0
      %1081 = vmatprep.subr.mxu0 0.0
      %1082 = vmatpush1.xpose.msra.mxu0 0.0
      %1083 = vmatprep.subr.mxu0 0.0
      %1084 = vmatpush1.xpose.msra.mxu0 0.0
      %1085 = vmatprep.subr.mxu0 0.0
      %1086 = vmatpush1.xpose.msra.mxu0 0.0
      %1087 = vmatprep.subr.mxu0 0.0
      %1088 = vmatpush1.xpose.msra.mxu0 0.0
      %1089 = vmatprep.subr.mxu0 0.0
      %1090 = vmatpush1.xpose.msra.mxu0 0.0
      %1091 = vmatprep.subr.mxu0 0.0
      %1092 = vmatpush1.xpose.msra.mxu0 0.0
      %1093 = vmatprep.subr.mxu0 0.0
      %1094 = vmatpush1.xpose.msra.mxu0 0.0
      %1095 = vmatprep.subr.mxu0 0.0
      %1096 = vmatpush1.xpose.msra.mxu0 0.0
      %1097 = vmatprep.mubr.f32.mxu0 %v875
      %1098 = vmatmul.mubr.f32.gmra.mrb[0].mxu0 %v874
      %v1099 = vpop.f32.mrb[0].mxu0
      %v1100 = vadd.f32 %v1015, %v1099
      %v1101 = vpop.f32.mrb[0].mxu0
      %1102 = vmatprep.mubr.f32.mxu0 %v879
      %1103 = vmatmul.mubr.f32.gmra.mrb[0].mxu0 %v878
      %v1104 = vpop.f32.mrb[0].mxu0
      %v1105 = vadd.f32 %v1020, %v1104
      %v1106 = vpop.f32.mrb[0].mxu0
      %1107 = vmatprep.mubr.f32.mxu0 %v883
      %1108 = vmatmul.mubr.f32.gmra.mrb[0].mxu0 %v882
      %v1109 = vpop.f32.mrb[0].mxu0
      %v1110 = vadd.f32 %v1025, %v1109
      %v1111 = vpop.f32.mrb[0].mxu0
      %1112 = vmatprep.mubr.f32.mxu0 %v887
      %1113 = vmatmul.mubr.f32.gmra.mrb[0].mxu0 %v886
      %v1114 = vpop.f32.mrb[0].mxu0
      %v1115 = vadd.f32 %v1030, %v1114
      %v1116 = vpop.f32.mrb[0].mxu0
      %1117 = vdwg.mxu0
      %v1118 = vmul.f32 %v1100, %v339
      %v1119 = vmul.f32 %v1105, %v340
      %v1120 = vmul.f32 %v1110, %v341
      %v1121 = vmul.f32 %v1115, %v342
      %v1122 = vadd.f32 %v1118, %v347
      %v1123 = vadd.f32 %v1119, %v348
      %v1124 = vadd.f32 %v1120, %v349
      %v1125 = vadd.f32 %v1121, %v350
      %v1126 = vsel %vm437, %v1122, -inf
      %1127 = vmax.xlane.f32.xlu0 %v1126
      %v1128 = vpop.xlane.xlu0 %1127
      %v1129 = vsel %vm437, %v1123, -inf
      %1130 = vmax.xlane.f32.xlu0 %v1129
      %v1131 = vpop.xlane.xlu0 %1130
      %v1132 = vsel %vm437, %v1124, -inf
      %1133 = vmax.xlane.f32.xlu0 %v1132
      %v1134 = vpop.xlane.xlu0 %1133
      %v1135 = vsel %vm437, %v1125, -inf
      %1136 = vmax.xlane.f32.xlu0 %v1135
      %v1137 = vpop.xlane.xlu0 %1136
      %v1138 = vsub.f32 %v1122, %v1128
      %v1139 = vsub.f32 %v1123, %v1131
      %v1140 = vsub.f32 %v1124, %v1134
      %v1141 = vsub.f32 %v1125, %v1137
      %v1142 = vmul.f32 %v1138, 1.442695
      %v1143 = vpow.pop %v1142
      %v1144 = vmul.f32 %v1139, 1.442695
      %v1145 = vpow.pop %v1144
      %v1146 = vmul.f32 %v1140, 1.442695
      %v1147 = vpow.pop %v1146
      %v1148 = vmul.f32 %v1141, 1.442695
      %v1149 = vpow.pop %v1148
      %v1150 = vsel %vm437, %v1143, 0.0
      %1151 = vadd.xlane.f32.xlu0 %v1150
      %v1152 = vpop.xlane.xlu0 %1151
      %v1153 = vsel %vm437, %v1145, 0.0
      %1154 = vadd.xlane.f32.xlu0 %v1153
      %v1155 = vpop.xlane.xlu0 %1154
      %v1156 = vsel %vm437, %v1147, 0.0
      %1157 = vadd.xlane.f32.xlu0 %v1156
      %v1158 = vpop.xlane.xlu0 %1157
      %v1159 = vsel %vm437, %v1149, 0.0
      %1160 = vadd.xlane.f32.xlu0 %v1159
      %v1161 = vpop.xlane.xlu0 %1160
      %v1162 = vrcp.pop %v1152
      %v1163 = vrcp.pop %v1155
      %v1164 = vrcp.pop %v1158
      %v1165 = vrcp.pop %v1161
      %v1166 = vmul.f32 %v1143, %v1162
      %v1167 = vmul.f32 %v1145, %v1163
      %v1168 = vmul.f32 %v1147, %v1164
      %v1169 = vmul.f32 %v1149, %v1165
      %v1170 = vmul.f32 %v677, %v677
      %v1171 = vmul.f32 %v679, %v679
      %v1172 = vmul.f32 %v770, %v770
      %v1173 = vmul.f32 %v772, %v772
      %v1174 = vmul.f32 %v681, %v681
      %v1175 = vmul.f32 %v683, %v683
      %v1176 = vmul.f32 %v774, %v774
      %v1177 = vmul.f32 %v776, %v776
      %v1178 = vmul.f32 %v687, %v687
      %v1179 = vmul.f32 %v689, %v689
      %v1180 = vmul.f32 %v780, %v780
      %v1181 = vmul.f32 %v782, %v782
      %v1182 = vmul.f32 %v691, %v691
      %v1183 = vmul.f32 %v693, %v693
      %v1184 = vmul.f32 %v784, %v784
      %v1185 = vmul.f32 %v786, %v786
      %v1186 = vadd.f32 %v1170, %v1171
      %v1187 = vadd.f32 %v1186, %v1172
      %v1188 = vadd.f32 %v1187, %v1173
      %1189 = vadd.xlane.f32.xlu0 %v1188
      %v1190 = vpop.xlane.xlu0 %1189
      %v1191 = vadd.f32 %v1174, %v1175
      %v1192 = vadd.f32 %v1191, %v1176
      %v1193 = vadd.f32 %v1192, %v1177
      %1194 = vadd.xlane.f32.xlu0 %v1193
      %v1195 = vpop.xlane.xlu0 %1194
      %v1196 = vadd.f32 %v1178, %v1179
      %v1197 = vadd.f32 %v1196, %v1180
      %v1198 = vadd.f32 %v1197, %v1181
      %1199 = vadd.xlane.f32.xlu0 %v1198
      %v1200 = vpop.xlane.xlu0 %1199
      %v1201 = vadd.f32 %v1182, %v1183
      %v1202 = vadd.f32 %v1201, %v1184
      %v1203 = vadd.f32 %v1202, %v1185
      %1204 = vadd.xlane.f32.xlu0 %v1203
      %v1205 = vpop.xlane.xlu0 %1204
      %v1206 = vmax.f32 %v1190, 1e-24
      %v1207 = vmax.f32 %v1195, 1e-24
      %v1208 = vmax.f32 %v1200, 1e-24
      %v1209 = vmax.f32 %v1205, 1e-24
      %v1210 = vrsqrt.pop %v1206
      %v1211 = vrsqrt.pop %v1207
      %v1212 = vrsqrt.pop %v1208
      %v1213 = vrsqrt.pop %v1209
      %v1214 = vmul.f32 %v677, %v1210
      %v1215 = vmul.f32 %v679, %v1210
      %v1216 = vmul.f32 %v770, %v1210
      %v1217 = vmul.f32 %v772, %v1210
      %v1218 = vmul.f32 %v681, %v1211
      %v1219 = vmul.f32 %v683, %v1211
      %v1220 = vmul.f32 %v774, %v1211
      %v1221 = vmul.f32 %v776, %v1211
      %v1222 = vmul.f32 %v687, %v1212
      %v1223 = vmul.f32 %v689, %v1212
      %v1224 = vmul.f32 %v780, %v1212
      %v1225 = vmul.f32 %v782, %v1212
      %v1226 = vmul.f32 %v691, %v1213
      %v1227 = vmul.f32 %v693, %v1213
      %v1228 = vmul.f32 %v784, %v1213
      %v1229 = vmul.f32 %v786, %v1213
      %v1230 = vmul.f32 %v697, %v697
      %v1231 = vmul.f32 %v699, %v699
      %v1232 = vmul.f32 %v790, %v790
      %v1233 = vmul.f32 %v792, %v792
      %v1234 = vmul.f32 %v701, %v701
      %v1235 = vmul.f32 %v703, %v703
      %v1236 = vmul.f32 %v794, %v794
      %v1237 = vmul.f32 %v796, %v796
      %v1238 = vmul.f32 %v707, %v707
      %v1239 = vmul.f32 %v709, %v709
      %v1240 = vmul.f32 %v800, %v800
      %v1241 = vmul.f32 %v802, %v802
      %v1242 = vmul.f32 %v711, %v711
      %v1243 = vmul.f32 %v713, %v713
      %v1244 = vmul.f32 %v804, %v804
      %v1245 = vmul.f32 %v806, %v806
      %v1246 = vadd.f32 %v1230, %v1231
      %v1247 = vadd.f32 %v1246, %v1232
      %v1248 = vadd.f32 %v1247, %v1233
      %1249 = vadd.xlane.f32.xlu0 %v1248
      %v1250 = vpop.xlane.xlu0 %1249
      %v1251 = vadd.f32 %v1234, %v1235
      %v1252 = vadd.f32 %v1251, %v1236
      %v1253 = vadd.f32 %v1252, %v1237
      %1254 = vadd.xlane.f32.xlu0 %v1253
      %v1255 = vpop.xlane.xlu0 %1254
      %v1256 = vadd.f32 %v1238, %v1239
      %v1257 = vadd.f32 %v1256, %v1240
      %v1258 = vadd.f32 %v1257, %v1241
      %1259 = vadd.xlane.f32.xlu0 %v1258
      %v1260 = vpop.xlane.xlu0 %1259
      %v1261 = vadd.f32 %v1242, %v1243
      %v1262 = vadd.f32 %v1261, %v1244
      %v1263 = vadd.f32 %v1262, %v1245
      %1264 = vadd.xlane.f32.xlu0 %v1263
      %v1265 = vpop.xlane.xlu0 %1264
      %v1266 = vmax.f32 %v1250, 1e-24
      %v1267 = vmax.f32 %v1255, 1e-24
      %v1268 = vmax.f32 %v1260, 1e-24
      %v1269 = vmax.f32 %v1265, 1e-24
      %v1270 = vrsqrt.pop %v1266
      %v1271 = vrsqrt.pop %v1267
      %v1272 = vrsqrt.pop %v1268
      %v1273 = vrsqrt.pop %v1269
      %v1274 = vmul.f32 %v697, %v1270
      %v1275 = vmul.f32 %v699, %v1270
      %v1276 = vmul.f32 %v790, %v1270
      %v1277 = vmul.f32 %v792, %v1270
      %v1278 = vmul.f32 %v701, %v1271
      %v1279 = vmul.f32 %v703, %v1271
      %v1280 = vmul.f32 %v794, %v1271
      %v1281 = vmul.f32 %v796, %v1271
      %v1282 = vmul.f32 %v707, %v1272
      %v1283 = vmul.f32 %v709, %v1272
      %v1284 = vmul.f32 %v800, %v1272
      %v1285 = vmul.f32 %v802, %v1272
      %v1286 = vmul.f32 %v711, %v1273
      %v1287 = vmul.f32 %v713, %v1273
      %v1288 = vmul.f32 %v804, %v1273
      %v1289 = vmul.f32 %v806, %v1273
      %1290 = vmatprep.subr.mxu0 %v1275
      %1291 = vmatpush1.xpose.msra.mxu0 %v1274
      %1292 = vmatprep.subr.mxu0 %v1279
      %1293 = vmatpush1.xpose.msra.mxu0 %v1278
      %1294 = vmatprep.subr.mxu0 %v1283
      %1295 = vmatpush1.xpose.msra.mxu0 %v1282
      %1296 = vmatprep.subr.mxu0 %v1287
      %1297 = vmatpush1.xpose.msra.mxu0 %v1286
      %1298 = vmatprep.subr.mxu0 0.0
      %1299 = vmatpush1.xpose.msra.mxu0 0.0
      %1300 = vmatprep.subr.mxu0 0.0
      %1301 = vmatpush1.xpose.msra.mxu0 0.0
      %1302 = vmatprep.subr.mxu0 0.0
      %1303 = vmatpush1.xpose.msra.mxu0 0.0
      %1304 = vmatprep.subr.mxu0 0.0
      %1305 = vmatpush1.xpose.msra.mxu0 0.0
      %1306 = vmatprep.subr.mxu0 0.0
      %1307 = vmatpush1.xpose.msra.mxu0 0.0
      %1308 = vmatprep.subr.mxu0 0.0
      %1309 = vmatpush1.xpose.msra.mxu0 0.0
      %1310 = vmatprep.subr.mxu0 0.0
      %1311 = vmatpush1.xpose.msra.mxu0 0.0
      %1312 = vmatprep.subr.mxu0 0.0
      %1313 = vmatpush1.xpose.msra.mxu0 0.0
      %1314 = vmatprep.subr.mxu0 0.0
      %1315 = vmatpush1.xpose.msra.mxu0 0.0
      %1316 = vmatprep.subr.mxu0 0.0
      %1317 = vmatpush1.xpose.msra.mxu0 0.0
      %1318 = vmatprep.subr.mxu0 0.0
      %1319 = vmatpush1.xpose.msra.mxu0 0.0
      %1320 = vmatprep.subr.mxu0 0.0
      %1321 = vmatpush1.xpose.msra.mxu0 0.0
      %1322 = vmatprep.subr.mxu0 0.0
      %1323 = vmatpush1.xpose.msra.mxu0 0.0
      %1324 = vmatprep.subr.mxu0 0.0
      %1325 = vmatpush1.xpose.msra.mxu0 0.0
      %1326 = vmatprep.subr.mxu0 0.0
      %1327 = vmatpush1.xpose.msra.mxu0 0.0
      %1328 = vmatprep.subr.mxu0 0.0
      %1329 = vmatpush1.xpose.msra.mxu0 0.0
      %1330 = vmatprep.subr.mxu0 0.0
      %1331 = vmatpush1.xpose.msra.mxu0 0.0
      %1332 = vmatprep.subr.mxu0 0.0
      %1333 = vmatpush1.xpose.msra.mxu0 0.0
      %1334 = vmatprep.subr.mxu0 0.0
      %1335 = vmatpush1.xpose.msra.mxu0 0.0
      %1336 = vmatprep.subr.mxu0 0.0
      %1337 = vmatpush1.xpose.msra.mxu0 0.0
      %1338 = vmatprep.subr.mxu0 0.0
      %1339 = vmatpush1.xpose.msra.mxu0 0.0
      %1340 = vmatprep.subr.mxu0 0.0
      %1341 = vmatpush1.xpose.msra.mxu0 0.0
      %1342 = vmatprep.subr.mxu0 0.0
      %1343 = vmatpush1.xpose.msra.mxu0 0.0
      %1344 = vmatprep.subr.mxu0 0.0
      %1345 = vmatpush1.xpose.msra.mxu0 0.0
      %1346 = vmatprep.subr.mxu0 0.0
      %1347 = vmatpush1.xpose.msra.mxu0 0.0
      %1348 = vmatprep.subr.mxu0 0.0
      %1349 = vmatpush1.xpose.msra.mxu0 0.0
      %1350 = vmatprep.subr.mxu0 0.0
      %1351 = vmatpush1.xpose.msra.mxu0 0.0
      %1352 = vmatprep.subr.mxu0 0.0
      %1353 = vmatpush1.xpose.msra.mxu0 0.0
      %1354 = vmatprep.mubr.f32.mxu0 %v1215
      %1355 = vmatmul.mubr.f32.gmra.mrb[0].mxu0 %v1214
      %v1356 = vpop.f32.mrb[0].mxu0
      %v1357 = vadd.f32 0.0, %v1356
      %v1358 = vpop.f32.mrb[0].mxu0
      %1359 = vmatprep.mubr.f32.mxu0 %v1219
      %1360 = vmatmul.mubr.f32.gmra.mrb[0].mxu0 %v1218
      %v1361 = vpop.f32.mrb[0].mxu0
      %v1362 = vadd.f32 0.0, %v1361
      %v1363 = vpop.f32.mrb[0].mxu0
      %1364 = vmatprep.mubr.f32.mxu0 %v1223
      %1365 = vmatmul.mubr.f32.gmra.mrb[0].mxu0 %v1222
      %v1366 = vpop.f32.mrb[0].mxu0
      %v1367 = vadd.f32 0.0, %v1366
      %v1368 = vpop.f32.mrb[0].mxu0
      %1369 = vmatprep.mubr.f32.mxu0 %v1227
      %1370 = vmatmul.mubr.f32.gmra.mrb[0].mxu0 %v1226
      %v1371 = vpop.f32.mrb[0].mxu0
      %v1372 = vadd.f32 0.0, %v1371
      %v1373 = vpop.f32.mrb[0].mxu0
      %1374 = vdwg.mxu0
      %1375 = vmatprep.subr.mxu0 %v1277
      %1376 = vmatpush1.xpose.msra.mxu0 %v1276
      %1377 = vmatprep.subr.mxu0 %v1281
      %1378 = vmatpush1.xpose.msra.mxu0 %v1280
      %1379 = vmatprep.subr.mxu0 %v1285
      %1380 = vmatpush1.xpose.msra.mxu0 %v1284
      %1381 = vmatprep.subr.mxu0 %v1289
      %1382 = vmatpush1.xpose.msra.mxu0 %v1288
      %1383 = vmatprep.subr.mxu0 0.0
      %1384 = vmatpush1.xpose.msra.mxu0 0.0
      %1385 = vmatprep.subr.mxu0 0.0
      %1386 = vmatpush1.xpose.msra.mxu0 0.0
      %1387 = vmatprep.subr.mxu0 0.0
      %1388 = vmatpush1.xpose.msra.mxu0 0.0
      %1389 = vmatprep.subr.mxu0 0.0
      %1390 = vmatpush1.xpose.msra.mxu0 0.0
      %1391 = vmatprep.subr.mxu0 0.0
      %1392 = vmatpush1.xpose.msra.mxu0 0.0
      %1393 = vmatprep.subr.mxu0 0.0
      %1394 = vmatpush1.xpose.msra.mxu0 0.0
      %1395 = vmatprep.subr.mxu0 0.0
      %1396 = vmatpush1.xpose.msra.mxu0 0.0
      %1397 = vmatprep.subr.mxu0 0.0
      %1398 = vmatpush1.xpose.msra.mxu0 0.0
      %1399 = vmatprep.subr.mxu0 0.0
      %1400 = vmatpush1.xpose.msra.mxu0 0.0
      %1401 = vmatprep.subr.mxu0 0.0
      %1402 = vmatpush1.xpose.msra.mxu0 0.0
      %1403 = vmatprep.subr.mxu0 0.0
      %1404 = vmatpush1.xpose.msra.mxu0 0.0
      %1405 = vmatprep.subr.mxu0 0.0
      %1406 = vmatpush1.xpose.msra.mxu0 0.0
      %1407 = vmatprep.subr.mxu0 0.0
      %1408 = vmatpush1.xpose.msra.mxu0 0.0
      %1409 = vmatprep.subr.mxu0 0.0
      %1410 = vmatpush1.xpose.msra.mxu0 0.0
      %1411 = vmatprep.subr.mxu0 0.0
      %1412 = vmatpush1.xpose.msra.mxu0 0.0
      %1413 = vmatprep.subr.mxu0 0.0
      %1414 = vmatpush1.xpose.msra.mxu0 0.0
      %1415 = vmatprep.subr.mxu0 0.0
      %1416 = vmatpush1.xpose.msra.mxu0 0.0
      %1417 = vmatprep.subr.mxu0 0.0
      %1418 = vmatpush1.xpose.msra.mxu0 0.0
      %1419 = vmatprep.subr.mxu0 0.0
      %1420 = vmatpush1.xpose.msra.mxu0 0.0
      %1421 = vmatprep.subr.mxu0 0.0
      %1422 = vmatpush1.xpose.msra.mxu0 0.0
      %1423 = vmatprep.subr.mxu0 0.0
      %1424 = vmatpush1.xpose.msra.mxu0 0.0
      %1425 = vmatprep.subr.mxu0 0.0
      %1426 = vmatpush1.xpose.msra.mxu0 0.0
      %1427 = vmatprep.subr.mxu0 0.0
      %1428 = vmatpush1.xpose.msra.mxu0 0.0
      %1429 = vmatprep.subr.mxu0 0.0
      %1430 = vmatpush1.xpose.msra.mxu0 0.0
      %1431 = vmatprep.subr.mxu0 0.0
      %1432 = vmatpush1.xpose.msra.mxu0 0.0
      %1433 = vmatprep.subr.mxu0 0.0
      %1434 = vmatpush1.xpose.msra.mxu0 0.0
      %1435 = vmatprep.subr.mxu0 0.0
      %1436 = vmatpush1.xpose.msra.mxu0 0.0
      %1437 = vmatprep.subr.mxu0 0.0
      %1438 = vmatpush1.xpose.msra.mxu0 0.0
      %1439 = vmatprep.mubr.f32.mxu0 %v1217
      %1440 = vmatmul.mubr.f32.gmra.mrb[0].mxu0 %v1216
      %v1441 = vpop.f32.mrb[0].mxu0
      %v1442 = vadd.f32 %v1357, %v1441
      %v1443 = vpop.f32.mrb[0].mxu0
      %1444 = vmatprep.mubr.f32.mxu0 %v1221
      %1445 = vmatmul.mubr.f32.gmra.mrb[0].mxu0 %v1220
      %v1446 = vpop.f32.mrb[0].mxu0
      %v1447 = vadd.f32 %v1362, %v1446
      %v1448 = vpop.f32.mrb[0].mxu0
      %1449 = vmatprep.mubr.f32.mxu0 %v1225
      %1450 = vmatmul.mubr.f32.gmra.mrb[0].mxu0 %v1224
      %v1451 = vpop.f32.mrb[0].mxu0
      %v1452 = vadd.f32 %v1367, %v1451
      %v1453 = vpop.f32.mrb[0].mxu0
      %1454 = vmatprep.mubr.f32.mxu0 %v1229
      %1455 = vmatmul.mubr.f32.gmra.mrb[0].mxu0 %v1228
      %v1456 = vpop.f32.mrb[0].mxu0
      %v1457 = vadd.f32 %v1372, %v1456
      %v1458 = vpop.f32.mrb[0].mxu0
      %1459 = vdwg.mxu0
      %v1460 = vmul.f32 %v1442, %v343
      %v1461 = vmul.f32 %v1447, %v344
      %v1462 = vmul.f32 %v1452, %v345
      %v1463 = vmul.f32 %v1457, %v346
      %v1464 = vadd.f32 %v1460, %v347
      %v1465 = vadd.f32 %v1461, %v348
      %v1466 = vadd.f32 %v1462, %v349
      %v1467 = vadd.f32 %v1463, %v350
      %v1468 = vsel %vm437, %v1464, -inf
      %1469 = vmax.xlane.f32.xlu0 %v1468
      %v1470 = vpop.xlane.xlu0 %1469
      %v1471 = vsel %vm437, %v1465, -inf
      %1472 = vmax.xlane.f32.xlu0 %v1471
      %v1473 = vpop.xlane.xlu0 %1472
      %v1474 = vsel %vm437, %v1466, -inf
      %1475 = vmax.xlane.f32.xlu0 %v1474
      %v1476 = vpop.xlane.xlu0 %1475
      %v1477 = vsel %vm437, %v1467, -inf
      %1478 = vmax.xlane.f32.xlu0 %v1477
      %v1479 = vpop.xlane.xlu0 %1478
      %v1480 = vsub.f32 %v1464, %v1470
      %v1481 = vsub.f32 %v1465, %v1473
      %v1482 = vsub.f32 %v1466, %v1476
      %v1483 = vsub.f32 %v1467, %v1479
      %v1484 = vmul.f32 %v1480, 1.442695
      %v1485 = vpow.pop %v1484
      %v1486 = vmul.f32 %v1481, 1.442695
      %v1487 = vpow.pop %v1486
      %v1488 = vmul.f32 %v1482, 1.442695
      %v1489 = vpow.pop %v1488
      %v1490 = vmul.f32 %v1483, 1.442695
      %v1491 = vpow.pop %v1490
      %v1492 = vsel %vm437, %v1485, 0.0
      %1493 = vadd.xlane.f32.xlu0 %v1492
      %v1494 = vpop.xlane.xlu0 %1493
      %v1495 = vsel %vm437, %v1487, 0.0
      %1496 = vadd.xlane.f32.xlu0 %v1495
      %v1497 = vpop.xlane.xlu0 %1496
      %v1498 = vsel %vm437, %v1489, 0.0
      %1499 = vadd.xlane.f32.xlu0 %v1498
      %v1500 = vpop.xlane.xlu0 %1499
      %v1501 = vsel %vm437, %v1491, 0.0
      %1502 = vadd.xlane.f32.xlu0 %v1501
      %v1503 = vpop.xlane.xlu0 %1502
      %v1504 = vrcp.pop %v1494
      %v1505 = vrcp.pop %v1497
      %v1506 = vrcp.pop %v1500
      %v1507 = vrcp.pop %v1503
      %v1508 = vmul.f32 %v1485, %v1504
      %v1509 = vmul.f32 %v1487, %v1505
      %v1510 = vmul.f32 %v1489, %v1506
      %v1511 = vmul.f32 %v1491, %v1507
      %v1512 = vpack.c.bf16 %v1167, %v1166
      %v1513 = vpack.c.bf16 %v1169, %v1168
      %v1514 = vpack.c.bf16 %v721, %v717
      %v1515 = vpack.c.bf16 %v723, %v719
      %v1516 = vpack.c.bf16 %v814, %v810
      %v1517 = vpack.c.bf16 %v816, %v812
      %v1518 = vpack.c.bf16 %v731, %v727
      %v1519 = vpack.c.bf16 %v733, %v729
      %v1520 = vpack.c.bf16 %v824, %v820
      %v1521 = vpack.c.bf16 %v826, %v822
      %v1522 = vpack.c.bf16 %v1509, %v1508
      %v1523 = vpack.c.bf16 %v1511, %v1510
      %v1524 = vpack.c.bf16 %v535, %v531
      %v1525 = vpack.c.bf16 %v537, %v533
      %v1526 = vpack.c.bf16 %v628, %v624
      %v1527 = vpack.c.bf16 %v630, %v626
      %v1528 = vpack.c.bf16 %v545, %v541
      %v1529 = vpack.c.bf16 %v547, %v543
      %v1530 = vpack.c.bf16 %v638, %v634
      %v1531 = vpack.c.bf16 %v640, %v636
      %v1533 = vsel %vm437, %v1522, 0
      %v1536 = vsel %vm437, %v1523, 0
      %1538 = vmatprep.subr.bf16.mxu0 %v1525
      %1539 = vmatpush1.bf16.msra.mxu0 %v1524
      %1540 = vmatprep.subr.bf16.mxu0 %v1529
      %1541 = vmatpush1.bf16.msra.mxu0 %v1528
      %1542 = vmatprep.subr.bf16.mxu0 0
      %1543 = vmatpush1.bf16.msra.mxu0 0
      %1544 = vmatprep.subr.bf16.mxu0 0
      %1545 = vmatpush1.bf16.msra.mxu0 0
      %1546 = vmatprep.subr.bf16.mxu0 0
      %1547 = vmatpush1.bf16.msra.mxu0 0
      %1548 = vmatprep.subr.bf16.mxu0 0
      %1549 = vmatpush1.bf16.msra.mxu0 0
      %1550 = vmatprep.subr.bf16.mxu0 0
      %1551 = vmatpush1.bf16.msra.mxu0 0
      %1552 = vmatprep.subr.bf16.mxu0 0
      %1553 = vmatpush1.bf16.msra.mxu0 0
      %1554 = vmatprep.subr.bf16.mxu0 0
      %1555 = vmatpush1.bf16.msra.mxu0 0
      %1556 = vmatprep.subr.bf16.mxu0 0
      %1557 = vmatpush1.bf16.msra.mxu0 0
      %1558 = vmatprep.subr.bf16.mxu0 0
      %1559 = vmatpush1.bf16.msra.mxu0 0
      %1560 = vmatprep.subr.bf16.mxu0 0
      %1561 = vmatpush1.bf16.msra.mxu0 0
      %1562 = vmatprep.subr.bf16.mxu0 0
      %1563 = vmatpush1.bf16.msra.mxu0 0
      %1564 = vmatprep.subr.bf16.mxu0 0
      %1565 = vmatpush1.bf16.msra.mxu0 0
      %1566 = vmatprep.subr.bf16.mxu0 0
      %1567 = vmatpush1.bf16.msra.mxu0 0
      %1568 = vmatprep.subr.bf16.mxu0 0
      %1569 = vmatpush1.bf16.msra.mxu0 0
      %1570 = vmatprep.mubr.bf16.mxu0 0
      %1571 = vmatmul.mubr.bf16.gmra.mrb[0].mxu0 %v1533
      %v1572 = vpop.f32.mrb[0].mxu0
      %v1573 = vadd.f32 0.0, %v1572
      %v1574 = vpop.f32.mrb[0].mxu0
      %v1575 = vadd.f32 0.0, %v1574
      %v1576 = vpop.f32.mrb[0].mxu0
      %v1577 = vadd.f32 0.0, %v1576
      %v1578 = vpop.f32.mrb[0].mxu0
      %v1579 = vadd.f32 0.0, %v1578
      %1580 = vmatprep.mubr.bf16.mxu0 0
      %1581 = vmatmul.mubr.bf16.gmra.mrb[0].mxu0 %v1536
      %v1582 = vpop.f32.mrb[0].mxu0
      %v1583 = vadd.f32 0.0, %v1582
      %v1584 = vpop.f32.mrb[0].mxu0
      %v1585 = vadd.f32 0.0, %v1584
      %v1586 = vpop.f32.mrb[0].mxu0
      %v1587 = vadd.f32 0.0, %v1586
      %v1588 = vpop.f32.mrb[0].mxu0
      %v1589 = vadd.f32 0.0, %v1588
      %1590 = vdwg.mxu0
      %1591 = vmatprep.subr.bf16.mxu0 %v1527
      %1592 = vmatpush1.bf16.msra.mxu0 %v1526
      %1593 = vmatprep.subr.bf16.mxu0 %v1531
      %1594 = vmatpush1.bf16.msra.mxu0 %v1530
      %1595 = vmatprep.subr.bf16.mxu0 0
      %1596 = vmatpush1.bf16.msra.mxu0 0
      %1597 = vmatprep.subr.bf16.mxu0 0
      %1598 = vmatpush1.bf16.msra.mxu0 0
      %1599 = vmatprep.subr.bf16.mxu0 0
      %1600 = vmatpush1.bf16.msra.mxu0 0
      %1601 = vmatprep.subr.bf16.mxu0 0
      %1602 = vmatpush1.bf16.msra.mxu0 0
      %1603 = vmatprep.subr.bf16.mxu0 0
      %1604 = vmatpush1.bf16.msra.mxu0 0
      %1605 = vmatprep.subr.bf16.mxu0 0
      %1606 = vmatpush1.bf16.msra.mxu0 0
      %1607 = vmatprep.subr.bf16.mxu0 0
      %1608 = vmatpush1.bf16.msra.mxu0 0
      %1609 = vmatprep.subr.bf16.mxu0 0
      %1610 = vmatpush1.bf16.msra.mxu0 0
      %1611 = vmatprep.subr.bf16.mxu0 0
      %1612 = vmatpush1.bf16.msra.mxu0 0
      %1613 = vmatprep.subr.bf16.mxu0 0
      %1614 = vmatpush1.bf16.msra.mxu0 0
      %1615 = vmatprep.subr.bf16.mxu0 0
      %1616 = vmatpush1.bf16.msra.mxu0 0
      %1617 = vmatprep.subr.bf16.mxu0 0
      %1618 = vmatpush1.bf16.msra.mxu0 0
      %1619 = vmatprep.subr.bf16.mxu0 0
      %1620 = vmatpush1.bf16.msra.mxu0 0
      %1621 = vmatprep.subr.bf16.mxu0 0
      %1622 = vmatpush1.bf16.msra.mxu0 0
      %1623 = vmatprep.mubr.bf16.mxu0 0
      %1624 = vmatmul.mubr.bf16.gmra.mrb[0].mxu0 %v1533
      %v1625 = vpop.f32.mrb[0].mxu0
      %v1626 = vadd.f32 0.0, %v1625
      %v1627 = vpop.f32.mrb[0].mxu0
      %v1628 = vadd.f32 0.0, %v1627
      %v1629 = vpop.f32.mrb[0].mxu0
      %v1630 = vadd.f32 0.0, %v1629
      %v1631 = vpop.f32.mrb[0].mxu0
      %v1632 = vadd.f32 0.0, %v1631
      %1633 = vmatprep.mubr.bf16.mxu0 0
      %1634 = vmatmul.mubr.bf16.gmra.mrb[0].mxu0 %v1536
      %v1635 = vpop.f32.mrb[0].mxu0
      %v1636 = vadd.f32 0.0, %v1635
      %v1637 = vpop.f32.mrb[0].mxu0
      %v1638 = vadd.f32 0.0, %v1637
      %v1639 = vpop.f32.mrb[0].mxu0
      %v1640 = vadd.f32 0.0, %v1639
      %v1641 = vpop.f32.mrb[0].mxu0
      %v1642 = vadd.f32 0.0, %v1641
      %1643 = vdwg.mxu0
      %v1645 = vsel %vm437, %v1512, 0
      %v1648 = vsel %vm437, %v1513, 0
      %1650 = vmatprep.subr.bf16.mxu0 %v1515
      %1651 = vmatpush1.bf16.msra.mxu0 %v1514
      %1652 = vmatprep.subr.bf16.mxu0 %v1519
      %1653 = vmatpush1.bf16.msra.mxu0 %v1518
      %1654 = vmatprep.subr.bf16.mxu0 0
      %1655 = vmatpush1.bf16.msra.mxu0 0
      %1656 = vmatprep.subr.bf16.mxu0 0
      %1657 = vmatpush1.bf16.msra.mxu0 0
      %1658 = vmatprep.subr.bf16.mxu0 0
      %1659 = vmatpush1.bf16.msra.mxu0 0
      %1660 = vmatprep.subr.bf16.mxu0 0
      %1661 = vmatpush1.bf16.msra.mxu0 0
      %1662 = vmatprep.subr.bf16.mxu0 0
      %1663 = vmatpush1.bf16.msra.mxu0 0
      %1664 = vmatprep.subr.bf16.mxu0 0
      %1665 = vmatpush1.bf16.msra.mxu0 0
      %1666 = vmatprep.subr.bf16.mxu0 0
      %1667 = vmatpush1.bf16.msra.mxu0 0
      %1668 = vmatprep.subr.bf16.mxu0 0
      %1669 = vmatpush1.bf16.msra.mxu0 0
      %1670 = vmatprep.subr.bf16.mxu0 0
      %1671 = vmatpush1.bf16.msra.mxu0 0
      %1672 = vmatprep.subr.bf16.mxu0 0
      %1673 = vmatpush1.bf16.msra.mxu0 0
      %1674 = vmatprep.subr.bf16.mxu0 0
      %1675 = vmatpush1.bf16.msra.mxu0 0
      %1676 = vmatprep.subr.bf16.mxu0 0
      %1677 = vmatpush1.bf16.msra.mxu0 0
      %1678 = vmatprep.subr.bf16.mxu0 0
      %1679 = vmatpush1.bf16.msra.mxu0 0
      %1680 = vmatprep.subr.bf16.mxu0 0
      %1681 = vmatpush1.bf16.msra.mxu0 0
      %1682 = vmatprep.mubr.bf16.mxu0 0
      %1683 = vmatmul.mubr.bf16.gmra.mrb[0].mxu0 %v1645
      %v1684 = vpop.f32.mrb[0].mxu0
      %v1685 = vadd.f32 %v1573, %v1684
      %v1686 = vpop.f32.mrb[0].mxu0
      %v1687 = vadd.f32 %v1575, %v1686
      %v1688 = vpop.f32.mrb[0].mxu0
      %v1689 = vadd.f32 %v1577, %v1688
      %v1690 = vpop.f32.mrb[0].mxu0
      %v1691 = vadd.f32 %v1579, %v1690
      %1692 = vmatprep.mubr.bf16.mxu0 0
      %1693 = vmatmul.mubr.bf16.gmra.mrb[0].mxu0 %v1648
      %v1694 = vpop.f32.mrb[0].mxu0
      %v1695 = vadd.f32 %v1583, %v1694
      %v1696 = vpop.f32.mrb[0].mxu0
      %v1697 = vadd.f32 %v1585, %v1696
      %v1698 = vpop.f32.mrb[0].mxu0
      %v1699 = vadd.f32 %v1587, %v1698
      %v1700 = vpop.f32.mrb[0].mxu0
      %v1701 = vadd.f32 %v1589, %v1700
      %1702 = vdwg.mxu0
      %1703 = vmatprep.subr.bf16.mxu0 %v1517
      %1704 = vmatpush1.bf16.msra.mxu0 %v1516
      %1705 = vmatprep.subr.bf16.mxu0 %v1521
      %1706 = vmatpush1.bf16.msra.mxu0 %v1520
      %1707 = vmatprep.subr.bf16.mxu0 0
      %1708 = vmatpush1.bf16.msra.mxu0 0
      %1709 = vmatprep.subr.bf16.mxu0 0
      %1710 = vmatpush1.bf16.msra.mxu0 0
      %1711 = vmatprep.subr.bf16.mxu0 0
      %1712 = vmatpush1.bf16.msra.mxu0 0
      %1713 = vmatprep.subr.bf16.mxu0 0
      %1714 = vmatpush1.bf16.msra.mxu0 0
      %1715 = vmatprep.subr.bf16.mxu0 0
      %1716 = vmatpush1.bf16.msra.mxu0 0
      %1717 = vmatprep.subr.bf16.mxu0 0
      %1718 = vmatpush1.bf16.msra.mxu0 0
      %1719 = vmatprep.subr.bf16.mxu0 0
      %1720 = vmatpush1.bf16.msra.mxu0 0
      %1721 = vmatprep.subr.bf16.mxu0 0
      %1722 = vmatpush1.bf16.msra.mxu0 0
      %1723 = vmatprep.subr.bf16.mxu0 0
      %1724 = vmatpush1.bf16.msra.mxu0 0
      %1725 = vmatprep.subr.bf16.mxu0 0
      %1726 = vmatpush1.bf16.msra.mxu0 0
      %1727 = vmatprep.subr.bf16.mxu0 0
      %1728 = vmatpush1.bf16.msra.mxu0 0
      %1729 = vmatprep.subr.bf16.mxu0 0
      %1730 = vmatpush1.bf16.msra.mxu0 0
      %1731 = vmatprep.subr.bf16.mxu0 0
      %1732 = vmatpush1.bf16.msra.mxu0 0
      %1733 = vmatprep.subr.bf16.mxu0 0
      %1734 = vmatpush1.bf16.msra.mxu0 0
      %1735 = vmatprep.mubr.bf16.mxu0 0
      %1736 = vmatmul.mubr.bf16.gmra.mrb[0].mxu0 %v1645
      %v1737 = vpop.f32.mrb[0].mxu0
      %v1738 = vadd.f32 %v1626, %v1737
      %v1739 = vpop.f32.mrb[0].mxu0
      %v1740 = vadd.f32 %v1628, %v1739
      %v1741 = vpop.f32.mrb[0].mxu0
      %v1742 = vadd.f32 %v1630, %v1741
      %v1743 = vpop.f32.mrb[0].mxu0
      %v1744 = vadd.f32 %v1632, %v1743
      %1745 = vmatprep.mubr.bf16.mxu0 0
      %1746 = vmatmul.mubr.bf16.gmra.mrb[0].mxu0 %v1648
      %v1747 = vpop.f32.mrb[0].mxu0
      %v1748 = vadd.f32 %v1636, %v1747
      %v1749 = vpop.f32.mrb[0].mxu0
      %v1750 = vadd.f32 %v1638, %v1749
      %v1751 = vpop.f32.mrb[0].mxu0
      %v1752 = vadd.f32 %v1640, %v1751
      %v1753 = vpop.f32.mrb[0].mxu0
      %v1754 = vadd.f32 %v1642, %v1753
      %1755 = vdwg.mxu0
      %v1756 = vpack.c.bf16 %v1689, %v1685
      %v1757 = vpack.c.bf16 %v1691, %v1687
      %v1758 = vpack.c.bf16 %v1742, %v1738
      %v1759 = vpack.c.bf16 %v1744, %v1740
      %v1760 = vpack.c.bf16 %v1699, %v1695
      %v1761 = vpack.c.bf16 %v1701, %v1697
      %v1762 = vpack.c.bf16 %v1752, %v1748
      %v1763 = vpack.c.bf16 %v1754, %v1750
      %v1768 = vunpack.c.l.b16 %v351
      %v1769 = vunpack.c.l.b16 %v352
      %v1770 = vunpack.c.l.b16 %v353
      %v1771 = vunpack.c.l.b16 %v354
      %v1772 = vpack.c.b16 %v1769, %v1768
      %v1773 = vpack.c.b16 %v1771, %v1770
      %v1775 = vsel %vm437, %v1772, 0
      %v1778 = vsel %vm437, %v1773, 0
      %1780 = vmatprep.subr.bf16.mxu0 %v1757
      %1781 = vmatpush1.bf16.msra.mxu0 %v1756
      %1782 = vmatprep.subr.bf16.mxu0 %v1761
      %1783 = vmatpush1.bf16.msra.mxu0 %v1760
      %1784 = vmatprep.subr.bf16.mxu0 0
      %1785 = vmatpush1.bf16.msra.mxu0 0
      %1786 = vmatprep.subr.bf16.mxu0 0
      %1787 = vmatpush1.bf16.msra.mxu0 0
      %1788 = vmatprep.subr.bf16.mxu0 0
      %1789 = vmatpush1.bf16.msra.mxu0 0
      %1790 = vmatprep.subr.bf16.mxu0 0
      %1791 = vmatpush1.bf16.msra.mxu0 0
      %1792 = vmatprep.subr.bf16.mxu0 0
      %1793 = vmatpush1.bf16.msra.mxu0 0
      %1794 = vmatprep.subr.bf16.mxu0 0
      %1795 = vmatpush1.bf16.msra.mxu0 0
      %1796 = vmatprep.subr.bf16.mxu0 0
      %1797 = vmatpush1.bf16.msra.mxu0 0
      %1798 = vmatprep.subr.bf16.mxu0 0
      %1799 = vmatpush1.bf16.msra.mxu0 0
      %1800 = vmatprep.subr.bf16.mxu0 0
      %1801 = vmatpush1.bf16.msra.mxu0 0
      %1802 = vmatprep.subr.bf16.mxu0 0
      %1803 = vmatpush1.bf16.msra.mxu0 0
      %1804 = vmatprep.subr.bf16.mxu0 0
      %1805 = vmatpush1.bf16.msra.mxu0 0
      %1806 = vmatprep.subr.bf16.mxu0 0
      %1807 = vmatpush1.bf16.msra.mxu0 0
      %1808 = vmatprep.subr.bf16.mxu0 0
      %1809 = vmatpush1.bf16.msra.mxu0 0
      %1810 = vmatprep.subr.bf16.mxu0 0
      %1811 = vmatpush1.bf16.msra.mxu0 0
      %1812 = vmatprep.mubr.bf16.mxu0 0
      %1813 = vmatmul.mubr.bf16.gmra.mrb[0].mxu0 %v1775
      %v1814 = vpop.f32.mrb[0].mxu0
      %v1815 = vadd.f32 0.0, %v1814
      %v1816 = vpop.f32.mrb[0].mxu0
      %v1817 = vadd.f32 0.0, %v1816
      %v1818 = vpop.f32.mrb[0].mxu0
      %v1819 = vadd.f32 0.0, %v1818
      %v1820 = vpop.f32.mrb[0].mxu0
      %v1821 = vadd.f32 0.0, %v1820
      %1822 = vmatprep.mubr.bf16.mxu0 0
      %1823 = vmatmul.mubr.bf16.gmra.mrb[0].mxu0 %v1778
      %v1824 = vpop.f32.mrb[0].mxu0
      %v1825 = vadd.f32 0.0, %v1824
      %v1826 = vpop.f32.mrb[0].mxu0
      %v1827 = vadd.f32 0.0, %v1826
      %v1828 = vpop.f32.mrb[0].mxu0
      %v1829 = vadd.f32 0.0, %v1828
      %v1830 = vpop.f32.mrb[0].mxu0
      %v1831 = vadd.f32 0.0, %v1830
      %1832 = vdwg.mxu0
      %1833 = vmatprep.subr.bf16.mxu0 %v1759
      %1834 = vmatpush1.bf16.msra.mxu0 %v1758
      %1835 = vmatprep.subr.bf16.mxu0 %v1763
      %1836 = vmatpush1.bf16.msra.mxu0 %v1762
      %1837 = vmatprep.subr.bf16.mxu0 0
      %1838 = vmatpush1.bf16.msra.mxu0 0
      %1839 = vmatprep.subr.bf16.mxu0 0
      %1840 = vmatpush1.bf16.msra.mxu0 0
      %1841 = vmatprep.subr.bf16.mxu0 0
      %1842 = vmatpush1.bf16.msra.mxu0 0
      %1843 = vmatprep.subr.bf16.mxu0 0
      %1844 = vmatpush1.bf16.msra.mxu0 0
      %1845 = vmatprep.subr.bf16.mxu0 0
      %1846 = vmatpush1.bf16.msra.mxu0 0
      %1847 = vmatprep.subr.bf16.mxu0 0
      %1848 = vmatpush1.bf16.msra.mxu0 0
      %1849 = vmatprep.subr.bf16.mxu0 0
      %1850 = vmatpush1.bf16.msra.mxu0 0
      %1851 = vmatprep.subr.bf16.mxu0 0
      %1852 = vmatpush1.bf16.msra.mxu0 0
      %1853 = vmatprep.subr.bf16.mxu0 0
      %1854 = vmatpush1.bf16.msra.mxu0 0
      %1855 = vmatprep.subr.bf16.mxu0 0
      %1856 = vmatpush1.bf16.msra.mxu0 0
      %1857 = vmatprep.subr.bf16.mxu0 0
      %1858 = vmatpush1.bf16.msra.mxu0 0
      %1859 = vmatprep.subr.bf16.mxu0 0
      %1860 = vmatpush1.bf16.msra.mxu0 0
      %1861 = vmatprep.subr.bf16.mxu0 0
      %1862 = vmatpush1.bf16.msra.mxu0 0
      %1863 = vmatprep.subr.bf16.mxu0 0
      %1864 = vmatpush1.bf16.msra.mxu0 0
      %1865 = vmatprep.mubr.bf16.mxu0 0
      %1866 = vmatmul.mubr.bf16.gmra.mrb[0].mxu0 %v1775
      %v1867 = vpop.f32.mrb[0].mxu0
      %v1868 = vadd.f32 0.0, %v1867
      %v1869 = vpop.f32.mrb[0].mxu0
      %v1870 = vadd.f32 0.0, %v1869
      %v1871 = vpop.f32.mrb[0].mxu0
      %v1872 = vadd.f32 0.0, %v1871
      %v1873 = vpop.f32.mrb[0].mxu0
      %v1874 = vadd.f32 0.0, %v1873
      %1875 = vmatprep.mubr.bf16.mxu0 0
      %1876 = vmatmul.mubr.bf16.gmra.mrb[0].mxu0 %v1778
      %v1877 = vpop.f32.mrb[0].mxu0
      %v1878 = vadd.f32 0.0, %v1877
      %v1879 = vpop.f32.mrb[0].mxu0
      %v1880 = vadd.f32 0.0, %v1879
      %v1881 = vpop.f32.mrb[0].mxu0
      %v1882 = vadd.f32 0.0, %v1881
      %v1883 = vpop.f32.mrb[0].mxu0
      %v1884 = vadd.f32 0.0, %v1883
      %1885 = vdwg.mxu0
      %v1886 = vadd.f32 %v1685, %v1815
      %v1887 = vadd.f32 %v1687, %v1817
      %v1888 = vadd.f32 %v1738, %v1868
      %v1889 = vadd.f32 %v1740, %v1870
      %v1890 = vadd.f32 %v1689, %v1819
      %v1891 = vadd.f32 %v1691, %v1821
      %v1892 = vadd.f32 %v1742, %v1872
      %v1893 = vadd.f32 %v1744, %v1874
      %v1894 = vadd.f32 %v1695, %v1825
      %v1895 = vadd.f32 %v1697, %v1827
      %v1896 = vadd.f32 %v1748, %v1878
      %v1897 = vadd.f32 %v1750, %v1880
      %v1898 = vadd.f32 %v1699, %v1829
      %v1899 = vadd.f32 %v1701, %v1831
      %v1900 = vadd.f32 %v1752, %v1882
      %v1901 = vadd.f32 %v1754, %v1884
      %1903 = vset.pattern.permute.xlu0 0
      %1904 = vperm.xlu0 %1903, %v355
      %v1905 = vpop.permute.xlu0 %1904
      %1908 = vset.pattern.permute.xlu0 0
      %1909 = vperm.xlu0 %1908, %v356
      %v1910 = vpop.permute.xlu0 %1909
      %1913 = vset.pattern.permute.xlu0 0
      %1914 = vperm.xlu0 %1913, %v357
      %v1915 = vpop.permute.xlu0 %1914
      %1918 = vset.pattern.permute.xlu0 0
      %1919 = vperm.xlu0 %1918, %v358
      %v1920 = vpop.permute.xlu0 %1919
      %v1922 = vadd.f32 %v1886, %v1905
      %v1923 = vadd.f32 %v1887, %v1905
      %v1924 = vadd.f32 %v1888, %v1905
      %v1925 = vadd.f32 %v1889, %v1905
      %v1926 = vadd.f32 %v1890, %v1910
      %v1927 = vadd.f32 %v1891, %v1910
      %v1928 = vadd.f32 %v1892, %v1910
      %v1929 = vadd.f32 %v1893, %v1910
      %v1930 = vadd.f32 %v1894, %v1915
      %v1931 = vadd.f32 %v1895, %v1915
      %v1932 = vadd.f32 %v1896, %v1915
      %v1933 = vadd.f32 %v1897, %v1915
      %v1934 = vadd.f32 %v1898, %v1920
      %v1935 = vadd.f32 %v1899, %v1920
      %v1936 = vadd.f32 %v1900, %v1920
      %v1937 = vadd.f32 %v1901, %v1920
      %1938 = vst [vmem:[%s325] sm:$0xff] %v1922
      %1939 = vst [vmem:[%s325 + $0x8] sm:$0xff] %v1923
      %1940 = vst [vmem:[%s325 + $0x10] sm:$0xff] %v1924
      %1941 = vst [vmem:[%s325 + $0x18] sm:$0xff] %v1925
      %1942 = vst [vmem:[%s325 + $0x20] sm:$0xff] %v1926
      %1943 = vst [vmem:[%s325 + $0x28] sm:$0xff] %v1927
      %1944 = vst [vmem:[%s325 + $0x30] sm:$0xff] %v1928
      %1945 = vst [vmem:[%s325 + $0x38] sm:$0xff] %v1929
      %1946 = vst [vmem:[%s325 + $0x40] sm:$0xff] %v1930
      %1947 = vst [vmem:[%s325 + $0x48] sm:$0xff] %v1931
      %1948 = vst [vmem:[%s325 + $0x50] sm:$0xff] %v1932
      %1949 = vst [vmem:[%s325 + $0x58] sm:$0xff] %v1933
      %1950 = vst [vmem:[%s325 + $0x60] sm:$0xff] %v1934
      %1951 = vst [vmem:[%s325 + $0x68] sm:$0xff] %v1935
      %1952 = vst [vmem:[%s325 + $0x70] sm:$0xff] %v1936
      %1953 = vst [vmem:[%s325 + $0x78] sm:$0xff] %v1937
      %p1954 = scmp.lt.s32.totalorder %s19, 1
      %s1955 = scalar_select %p1954, %s19, 1
      %s1956 = smul.addr %s1955, 16
      %s1957 = smul.addr %s1956, 8
      %s1958 = scalar_lea.vmem %s8, %s1957
      // Predicated region
      $region53: #{_lambda_.1} parent=51 // pred_check
        %p1959 = pneg %p215
      $region54: #{_lambda_.1} parent=51 // pred_check_branch
        %1961 = sbr.rel (%p1959) target = $region56
      $region55: #{_lambda_.1} parent=51 // pred_region
        _
      $region56: #{_lambda_.1} parent=51 // pred_fallthru
        _
    $region52: #{_lambda_.1} parent=5 // pred_fallthru
      _
    %p1962 = scmp.le.s32.totalorder 2, %s14
    // Predicated region
    $region57: #{_lambda_.1} parent=5 // pred_check
      %p1963 = pneg %p1962
    $region58: #{_lambda_.1} parent=5 // pred_check_branch
      %1965 = sbr.rel (%p1963) target = $region60
    $region59: #{_lambda_.1} parent=5 // pred_region
      %s1966 = ssub.s32 %s14, 2
      // Predicated region
      $region61: #{_lambda_.1} parent=59 // pred_check
        %p1967 = pneg %p221
      $region62: #{_lambda_.1} parent=59 // pred_check_branch
        %1969 = sbr.rel (%p1967) target = $region64
      $region63: #{_lambda_.1} parent=59 // pred_region
        %p1970 = scmp.lt.s32.totalorder %s20, 1
        %s1971 = scalar_select %p1970, %s20, 1
        %s1972 = smul.addr %s1971, 16
        %s1973 = smul.addr %s1972, 8
        %s1974 = scalar_lea.vmem %s8, %s1973
      $region64: #{_lambda_.1} parent=59 // pred_fallthru
        _
    $region60: #{_lambda_.1} parent=5 // pred_fallthru
      _
  $region6: #{_lambda_.1} parent=0 // loop_footer
    %s18 = sadd.s32 1, %s14
  $region7: #{_lambda_.1} parent=0 // loop_footer_branch
    %13 = sbr.rel target = $region3
  $region8: #{_lambda_.1} parent=0 // loop_exit
    _

</llo_original>
